<compile_context>
chip_gen: v7x
topology: tpu7x:2x2x1
jax: 0.10.0
libtpu: 0.0.40
codegen_flags: <defaults>
</compile_context>

<pallas_src>
import math

import jax
import jax.numpy as jnp
import numpy as np
from jax.experimental import pallas as pl
from jax.experimental.pallas import tpu as pltpu

R_EARTH_KM = 6371.0  # reference only; cancels inside the kernel's centrality ratio

LANE = 128  # TPU vreg lane width; batch blocks are sized in multiples of this


def _asin_sqrt_f32(hav):
    """arcsin(sqrt(hav)) for hav in [0, 1], float32.

    Single-precision fdlibm-style rational approximation, restructured so the whole
    (K, K, BB) tile needs a single EUP reciprocal (no VPU divide) and `hav` is reused
    directly as x*x on the small-angle branch.
    """
    pS0 = jnp.float32(1.6666586697e-01)
    pS1 = jnp.float32(-4.2743422091e-02)
    pS2 = jnp.float32(-8.6563630030e-03)
    qS1 = jnp.float32(-7.0662963390e-01)
    pio2 = jnp.float32(math.pi / 2)

    x = jnp.sqrt(hav)                         # sin of the half angle, in [0, 1]
    small = hav < 0.25                        # <=> x < 0.5
    t = jnp.where(small, hav, 0.5 * (1.0 - x))
    base = jnp.sqrt(t)                        # == x on the small branch
    p = t * (pS0 + t * (pS1 + t * pS2))
    q = 1.0 + t * qS1                         # q in (0.6, 1]
    tmp = base + base * (p * pl.reciprocal(q, approx=True))   # EUP, not a VPU divide
    return jnp.where(small, tmp, pio2 - 2.0 * tmp)


def hedge_kernel(temp_ref, trig_ref, probs_ref, out_ref):
    # temp_ref : SMEM (1,)         f32 -- temperature parameter
    # trig_ref : VMEM (4, K, BB)   f32 -- rows: sin(lat), cos(lat), sin(lon), cos(lon)
    # probs_ref: VMEM (K, BB)      f32 -- top-k probabilities (K sublanes, batch lanes)
    # out_ref  : VMEM (K, BB)      f32 -- redistributed probabilities
    k = trig_ref.shape[1]

    trig = trig_ref[...]                                              # (4, K, BB)
    sin_lat, cos_lat, sin_lon, cos_lon = trig[0], trig[1], trig[2], trig[3]

    # Pairwise terms: broadcast along the two K axes (sublane / cross-vreg).  The
    # batch stays in lanes, so all the (K, K, BB) math below is 128-lane dense.
    sin_lat_i, cos_lat_i = sin_lat[:, None, :], cos_lat[:, None, :]   # (K, 1, BB)
    sin_lon_i, cos_lon_i = sin_lon[:, None, :], cos_lon[:, None, :]
    sin_lat_j, cos_lat_j = sin_lat[None, :, :], cos_lat[None, :, :]   # (1, K, BB)
    sin_lon_j, cos_lon_j = sin_lon[None, :, :], cos_lon[None, :, :]

    # haversine(a) = sin^2(dlat/2) + cos(lat_i) cos(lat_j) sin^2(dlon/2), rewritten
    # with sin^2(d/2) = (1 - cos d)/2 and the cos-difference identity so the pairwise
    # part is pure VPU mul/add (no in-kernel trig beyond the arcsin below).
    coscos = cos_lat_i * cos_lat_j                                    # (K, K, BB)
    cos_dlat = coscos + sin_lat_i * sin_lat_j
    cos_dlon = cos_lon_i * cos_lon_j + sin_lon_i * sin_lon_j
    hav = 0.5 * ((1.0 - cos_dlat) + coscos * (1.0 - cos_dlon))
    hav = jnp.clip(hav, 0.0, 1.0)
    # TODO(synk): optional bf16 pairwise path for v6e/v7x (not v5e) once re-validated.

    # Great-circle distance up to the constant 2*R_earth factor (cancels in the ratio).
    dist = _asin_sqrt_f32(hav)                                        # (K, K, BB)

    # centrality = dist.mean() / dist.mean(axis=0); fold 1/K and 1/temperature into a
    # single scalar and use an EUP reciprocal for 1/col_sum.
    col_sum = jnp.sum(dist, axis=0)                                   # (K, BB), over i
    tot_sum = jnp.sum(col_sum, axis=0, keepdims=True)                 # (1, BB)
    inv_temp = 1.0 / temp_ref[0]
    logits = (tot_sum * (inv_temp * jnp.float32(1.0 / k))) * pl.reciprocal(
        col_sum, approx=True)                                         # (K, BB)

    # temperature softmax over K (max-subtracted: identical result, overflow-safe)
    logits = logits - jnp.max(logits, axis=0, keepdims=True)
    ex = jnp.exp(logits)
    soft = ex * pl.reciprocal(jnp.sum(ex, axis=0, keepdims=True), approx=True)

    # redistribute the top-k probabilities, preserving the original total mass.
    # The final rescale keeps an exact divide on a single (1, BB) row so the output
    # mass matches initial_sum exactly.
    topk = probs_ref[...]                                             # (K, BB)
    initial_sum = jnp.sum(topk, axis=0, keepdims=True)                # (1, BB)
    redist = topk * soft
    out_ref[...] = redist * (initial_sum / jnp.sum(redist, axis=0, keepdims=True))


def hedge_forward(topk_locations, topk_probs, temperature, *, block_b=LANE):
    """JAX/Pallas equivalent of HedgeLayer.forward.

    Accepts a single instance (topk_locations (K, 2), topk_probs (K,)) or a batch of
    independent instances ((B, K, 2), (B, K)); each instance follows the exact
    per-instance semantics of the PyTorch module.
    """
    topk_locations = jnp.asarray(topk_locations, jnp.float32)
    topk_probs = jnp.asarray(topk_probs, jnp.float32)
    single = topk_locations.ndim == 2
    if single:
        topk_locations = topk_locations[None]
        topk_probs = topk_probs[None]
    B, K, _ = topk_locations.shape

    bb = int(block_b)
    if bb % LANE != 0:
        raise ValueError(f"block_b must be a multiple of {LANE}")

    # One fused elementwise op over the whole batch (degrees -> radians -> sin/cos),
    # then one XLA transpose to the lane-major (4, K, B) layout the kernel expects.
    # TODO(synk): fold deg2rad + sin/cos into the kernel once lax.sin/cos Mosaic
    # lowering is confirmed on the target jaxlib.
    lat = jnp.deg2rad(topk_locations[..., 0])                         # (B, K)
    lon = jnp.deg2rad(topk_locations[..., 1])
    trig = jnp.stack(
        [jnp.sin(lat), jnp.cos(lat), jnp.sin(lon), jnp.cos(lon)], axis=0)  # (4, B, K)
    trig = jnp.transpose(trig, (0, 2, 1))                             # (4, K, B)
    probs = jnp.transpose(topk_probs, (1, 0))                         # (K, B)

    # Pad the batch (lane) axis to a multiple of the block size.  Tail-only edge
    # replication: padded lanes are valid replicas (results discarded when slicing).
    b_pad = ((B + bb - 1) // bb) * bb
    if b_pad != B:
        pad = b_pad - B
        trig = jnp.pad(trig, ((0, 0), (0, 0), (0, pad)), mode="edge")
        probs = jnp.pad(probs, ((0, 0), (0, pad)), mode="edge")

    temp = jnp.asarray(temperature, jnp.float32).reshape(1)

    out = pl.pallas_call(
        hedge_kernel,
        out_shape=jax.ShapeDtypeStruct((K, b_pad), jnp.float32),
        grid_spec=pltpu.PrefetchScalarGridSpec(
            num_scalar_prefetch=0,
            grid=(b_pad // bb,),
            in_specs=[
                pl.BlockSpec(memory_space=pltpu.MemorySpace.SMEM),    # temperature (1,)
                pl.BlockSpec((4, K, bb), lambda b: (0, 0, b)),        # trig slab
                pl.BlockSpec((K, bb), lambda b: (0, b)),              # probabilities
            ],
            out_specs=pl.BlockSpec((K, bb), lambda b: (0, b)),
        ),
        compiler_params=pltpu.CompilerParams(
            # Batch blocks are independent; shards across TensorCores where available.
            # TODO(synk): evaluate pltpu.CORE_PARALLEL on v7x (2 TCs/chip).
            dimension_semantics=("parallel",),
        ),
    )(temp, trig, probs)

    out = jnp.transpose(out, (1, 0))[:B]                              # (B, K)
    return out[0] if single else out


def _hedge_ref_single(topk_locations, topk_probs, temperature):
    """Plain-JAX single-instance reference matching the PyTorch module semantics."""
    lat = jnp.deg2rad(topk_locations[:, 0])
    lon = jnp.deg2rad(topk_locations[:, 1])
    dlat = lat[None, :] - lat[:, None]
    dlon = lon[None, :] - lon[:, None]
    a = (
        jnp.sin(dlat / 2) ** 2
        + jnp.cos(lat)[:, None] * jnp.cos(lat)[None, :] * jnp.sin(dlon / 2) ** 2
    )
    dist = 2.0 * R_EARTH_KM * jnp.arcsin(jnp.sqrt(jnp.clip(a, 0.0, 1.0)))
    centrality = dist.mean() / dist.mean(axis=0)
    ex = jnp.exp(centrality / temperature)
    soft = ex / ex.sum()
    initial_sum = topk_probs.sum()
    redist = topk_probs * soft
    return (redist / redist.sum() * initial_sum).astype(jnp.float32)


hedge_ref = jax.vmap(_hedge_ref_single, in_axes=(0, 0, None))


if __name__ == "__main__":
    key = jax.random.PRNGKey(0)
    k_lat, k_lon, k_logits = jax.random.split(key, 3)

    # 160 independent hedge instances, top-16 guesses each -> 2 grid blocks of 128.
    B, K = 160, 16
    lat_deg = jax.random.uniform(k_lat, (B, K), jnp.float32, -90.0, 90.0)
    lon_deg = jax.random.uniform(k_lon, (B, K), jnp.float32, -180.0, 180.0)
    topk_locations = jnp.stack([lat_deg, lon_deg], axis=-1)            # (B, K, 2)
    topk_probs = jax.nn.softmax(
        jax.random.normal(k_logits, (B, K), jnp.float32), axis=-1)     # (B, K)

    temperature = 1.0   # module's default Parameter init

    out = jax.block_until_ready(hedge_forward(topk_locations, topk_probs, temperature))
    assert out.shape == (B, K) and out.dtype == jnp.float32

    ref = hedge_ref(topk_locations, topk_probs, jnp.float32(temperature))
    max_err = np.abs(np.asarray(out) - np.asarray(ref)).max()
    assert np.allclose(np.asarray(out), np.asarray(ref), rtol=1e-2, atol=1e-5), max_err

    # single-instance path (module's native signature)
    out1 = jax.block_until_ready(
        hedge_forward(topk_locations[0], topk_probs[0], temperature))
    assert out1.shape == (K,)
    assert np.allclose(np.asarray(out1), np.asarray(ref[0]), rtol=1e-2, atol=1e-5)

    print("KERNEL_OK")
</pallas_src>

<mosaic_0001>
module attributes {stable_mosaic.version = 11 : i64} {
  func.func @hedge_kernel(%arg0: i32, %arg1: memref<1xf32, #tpu.memory_space<smem>>, %arg2: memref<4x16x128xf32, #tpu.memory_space<vmem>>, %arg3: memref<16x128xf32, #tpu.memory_space<vmem>>, %arg4: memref<16x128xf32, #tpu.memory_space<vmem>>) attributes {dimension_semantics = [#tpu.dimension_semantics<parallel>], iteration_bounds = array<i64: 2>, scalar_prefetch = 0 : i64, scratch_operands = 0 : i64, tpu.core_type = #tpu.core_type<tc>, window_params = [{transform_indices = @transform_0, window_bounds = array<i64: 1>}, {transform_indices = @transform_1, window_bounds = array<i64: 4, 16, 128>}, {transform_indices = @transform_2, window_bounds = array<i64: 16, 128>}, {transform_indices = @transform_3, window_bounds = array<i64: 16, 128>}]} {
    %c0 = arith.constant 0 : index
    %c0_0 = arith.constant 0 : index
    %c0_1 = arith.constant 0 : index
    %0 = vector.load %arg2[%c0, %c0_0, %c0_1] : memref<4x16x128xf32, #tpu.memory_space<vmem>>, vector<4x16x128xf32>
    %1 = vector.extract_strided_slice %0 {offsets = [0, 0, 0], sizes = [1, 16, 128], strides = [1, 1, 1]} : vector<4x16x128xf32> to vector<1x16x128xf32>
    %2 = vector.shape_cast %1 : vector<1x16x128xf32> to vector<16x128xf32>
    %3 = vector.extract_strided_slice %0 {offsets = [1, 0, 0], sizes = [1, 16, 128], strides = [1, 1, 1]} : vector<4x16x128xf32> to vector<1x16x128xf32>
    %4 = vector.shape_cast %3 : vector<1x16x128xf32> to vector<16x128xf32>
    %5 = vector.extract_strided_slice %0 {offsets = [2, 0, 0], sizes = [1, 16, 128], strides = [1, 1, 1]} : vector<4x16x128xf32> to vector<1x16x128xf32>
    %6 = vector.shape_cast %5 : vector<1x16x128xf32> to vector<16x128xf32>
    %7 = vector.extract_strided_slice %0 {offsets = [3, 0, 0], sizes = [1, 16, 128], strides = [1, 1, 1]} : vector<4x16x128xf32> to vector<1x16x128xf32>
    %8 = vector.shape_cast %7 : vector<1x16x128xf32> to vector<16x128xf32>
    %9 = vector.shape_cast %2 : vector<16x128xf32> to vector<16x1x128xf32>
    %10 = vector.shape_cast %4 : vector<16x128xf32> to vector<16x1x128xf32>
    %11 = vector.shape_cast %6 : vector<16x128xf32> to vector<16x1x128xf32>
    %12 = vector.shape_cast %8 : vector<16x128xf32> to vector<16x1x128xf32>
    %13 = vector.shape_cast %2 : vector<16x128xf32> to vector<1x16x128xf32>
    %14 = vector.shape_cast %4 : vector<16x128xf32> to vector<1x16x128xf32>
    %15 = vector.shape_cast %6 : vector<16x128xf32> to vector<1x16x128xf32>
    %16 = vector.shape_cast %8 : vector<16x128xf32> to vector<1x16x128xf32>
    %17 = vector.broadcast %10 : vector<16x1x128xf32> to vector<16x16x128xf32>
    %18 = vector.broadcast %14 : vector<1x16x128xf32> to vector<16x16x128xf32>
    %19 = arith.mulf %17, %18 : vector<16x16x128xf32>
    %20 = vector.broadcast %9 : vector<16x1x128xf32> to vector<16x16x128xf32>
    %21 = vector.broadcast %13 : vector<1x16x128xf32> to vector<16x16x128xf32>
    %22 = arith.mulf %20, %21 : vector<16x16x128xf32>
    %23 = arith.addf %19, %22 : vector<16x16x128xf32>
    %24 = vector.broadcast %12 : vector<16x1x128xf32> to vector<16x16x128xf32>
    %25 = vector.broadcast %16 : vector<1x16x128xf32> to vector<16x16x128xf32>
    %26 = arith.mulf %24, %25 : vector<16x16x128xf32>
    %27 = vector.broadcast %11 : vector<16x1x128xf32> to vector<16x16x128xf32>
    %28 = vector.broadcast %15 : vector<1x16x128xf32> to vector<16x16x128xf32>
    %29 = arith.mulf %27, %28 : vector<16x16x128xf32>
    %30 = arith.addf %26, %29 : vector<16x16x128xf32>
    %cst = arith.constant 1.000000e+00 : f32
    %31 = vector.broadcast %cst : f32 to vector<16x16x128xf32>
    %32 = arith.subf %31, %23 : vector<16x16x128xf32>
    %cst_2 = arith.constant 1.000000e+00 : f32
    %33 = vector.broadcast %cst_2 : f32 to vector<16x16x128xf32>
    %34 = arith.subf %33, %30 : vector<16x16x128xf32>
    %35 = arith.mulf %19, %34 : vector<16x16x128xf32>
    %36 = arith.addf %32, %35 : vector<16x16x128xf32>
    %cst_3 = arith.constant 5.000000e-01 : f32
    %37 = vector.broadcast %cst_3 : f32 to vector<16x16x128xf32>
    %38 = arith.mulf %37, %36 : vector<16x16x128xf32>
    %cst_4 = arith.constant 0.000000e+00 : f32
    %cst_5 = arith.constant 1.000000e+00 : f32
    %39 = vector.broadcast %cst_4 : f32 to vector<16x16x128xf32>
    %40 = arith.maximumf %39, %38 : vector<16x16x128xf32>
    %41 = vector.broadcast %cst_5 : f32 to vector<16x16x128xf32>
    %42 = arith.minimumf %41, %40 : vector<16x16x128xf32>
    %43 = math.sqrt %42 : vector<16x16x128xf32>
    %cst_6 = arith.constant 2.500000e-01 : f32
    %44 = vector.broadcast %cst_6 : f32 to vector<16x16x128xf32>
    %45 = arith.cmpf olt, %42, %44 : vector<16x16x128xf32>
    %cst_7 = arith.constant 1.000000e+00 : f32
    %46 = vector.broadcast %cst_7 : f32 to vector<16x16x128xf32>
    %47 = arith.subf %46, %43 : vector<16x16x128xf32>
    %cst_8 = arith.constant 5.000000e-01 : f32
    %48 = vector.broadcast %cst_8 : f32 to vector<16x16x128xf32>
    %49 = arith.mulf %48, %47 : vector<16x16x128xf32>
    %50 = arith.select %45, %42, %49 : vector<16x16x128xi1>, vector<16x16x128xf32>
    %51 = math.sqrt %50 : vector<16x16x128xf32>
    %cst_9 = arith.constant -0.008656363 : f32
    %52 = vector.broadcast %cst_9 : f32 to vector<16x16x128xf32>
    %53 = arith.mulf %50, %52 : vector<16x16x128xf32>
    %cst_10 = arith.constant -0.0427434221 : f32
    %54 = vector.broadcast %cst_10 : f32 to vector<16x16x128xf32>
    %55 = arith.addf %54, %53 : vector<16x16x128xf32>
    %56 = arith.mulf %50, %55 : vector<16x16x128xf32>
    %cst_11 = arith.constant 0.166665867 : f32
    %57 = vector.broadcast %cst_11 : f32 to vector<16x16x128xf32>
    %58 = arith.addf %57, %56 : vector<16x16x128xf32>
    %59 = arith.mulf %50, %58 : vector<16x16x128xf32>
    %cst_12 = arith.constant -0.706629634 : f32
    %60 = vector.broadcast %cst_12 : f32 to vector<16x16x128xf32>
    %61 = arith.mulf %50, %60 : vector<16x16x128xf32>
    %cst_13 = arith.constant 1.000000e+00 : f32
    %62 = vector.broadcast %cst_13 : f32 to vector<16x16x128xf32>
    %63 = arith.addf %62, %61 : vector<16x16x128xf32>
    %64 = tpu.reciprocal %63 {approx = true} : vector<16x16x128xf32> -> vector<16x16x128xf32>
    %65 = arith.mulf %59, %64 : vector<16x16x128xf32>
    %66 = arith.mulf %51, %65 : vector<16x16x128xf32>
    %67 = arith.addf %51, %66 : vector<16x16x128xf32>
    %cst_14 = arith.constant 2.000000e+00 : f32
    %68 = vector.broadcast %cst_14 : f32 to vector<16x16x128xf32>
    %69 = arith.mulf %68, %67 : vector<16x16x128xf32>
    %cst_15 = arith.constant 1.57079637 : f32
    %70 = vector.broadcast %cst_15 : f32 to vector<16x16x128xf32>
    %71 = arith.subf %70, %69 : vector<16x16x128xf32>
    %72 = arith.select %45, %67, %71 : vector<16x16x128xi1>, vector<16x16x128xf32>
    %cst_16 = arith.constant dense<0.000000e+00> : vector<16x128xf32>
    %73 = vector.multi_reduction <add>, %72, %cst_16 [0] : vector<16x16x128xf32> to vector<16x128xf32>
    %cst_17 = arith.constant dense<0.000000e+00> : vector<128xf32>
    %74 = vector.multi_reduction <add>, %73, %cst_17 [0] : vector<16x128xf32> to vector<128xf32>
    %75 = vector.shape_cast %74 : vector<128xf32> to vector<1x128xf32>
    %c0_18 = arith.constant 0 : index
    %76 = memref.load %arg1[%c0_18] : memref<1xf32, #tpu.memory_space<smem>>
    %cst_19 = arith.constant 1.000000e+00 : f32
    %77 = arith.divf %cst_19, %76 : f32
    %cst_20 = arith.constant 6.250000e-02 : f32
    %78 = arith.mulf %77, %cst_20 : f32
    %79 = vector.broadcast %78 : f32 to vector<1x128xf32>
    %80 = arith.mulf %75, %79 : vector<1x128xf32>
    %81 = tpu.reciprocal %73 {approx = true} : vector<16x128xf32> -> vector<16x128xf32>
    %82 = vector.broadcast %80 : vector<1x128xf32> to vector<16x128xf32>
    %83 = arith.mulf %82, %81 : vector<16x128xf32>
    %cst_21 = arith.constant dense<0xFF800000> : vector<128xf32>
    %84 = vector.multi_reduction <maximumf>, %83, %cst_21 [0] : vector<16x128xf32> to vector<128xf32>
    %85 = vector.shape_cast %84 : vector<128xf32> to vector<1x128xf32>
    %86 = vector.broadcast %85 : vector<1x128xf32> to vector<16x128xf32>
    %87 = arith.subf %83, %86 : vector<16x128xf32>
    %88 = math.exp %87 : vector<16x128xf32>
    %cst_22 = arith.constant dense<0.000000e+00> : vector<128xf32>
    %89 = vector.multi_reduction <add>, %88, %cst_22 [0] : vector<16x128xf32> to vector<128xf32>
    %90 = vector.shape_cast %89 : vector<128xf32> to vector<1x128xf32>
    %91 = tpu.reciprocal %90 {approx = true} : vector<1x128xf32> -> vector<1x128xf32>
    %92 = vector.broadcast %91 : vector<1x128xf32> to vector<16x128xf32>
    %93 = arith.mulf %88, %92 : vector<16x128xf32>
    %c0_23 = arith.constant 0 : index
    %c0_24 = arith.constant 0 : index
    %94 = vector.load %arg3[%c0_23, %c0_24] : memref<16x128xf32, #tpu.memory_space<vmem>>, vector<16x128xf32>
    %cst_25 = arith.constant dense<0.000000e+00> : vector<128xf32>
    %95 = vector.multi_reduction <add>, %94, %cst_25 [0] : vector<16x128xf32> to vector<128xf32>
    %96 = vector.shape_cast %95 : vector<128xf32> to vector<1x128xf32>
    %97 = arith.mulf %94, %93 : vector<16x128xf32>
    %cst_26 = arith.constant dense<0.000000e+00> : vector<128xf32>
    %98 = vector.multi_reduction <add>, %97, %cst_26 [0] : vector<16x128xf32> to vector<128xf32>
    %99 = vector.shape_cast %98 : vector<128xf32> to vector<1x128xf32>
    %100 = arith.divf %96, %99 : vector<1x128xf32>
    %101 = vector.broadcast %100 : vector<1x128xf32> to vector<16x128xf32>
    %102 = arith.mulf %97, %101 : vector<16x128xf32>
    %c0_27 = arith.constant 0 : index
    %c0_28 = arith.constant 0 : index
    %103 = vector.load %arg4[%c0_27, %c0_28] : memref<16x128xf32, #tpu.memory_space<vmem>>, vector<16x128xf32>
    tpu.vector_store %arg4[%c0_27, %c0_28], %102 {strides = array<i32>} : memref<16x128xf32, #tpu.memory_space<vmem>>, vector<16x128xf32>,
    return
  }
  func.func @transform_0(%arg0: i32) -> i32 {
    %c0_i32 = arith.constant 0 : i32
    %c0_i32_0 = arith.constant 0 : i32
    return %c0_i32 : i32
  }
  func.func @transform_1(%arg0: i32) -> (i32, i32, i32) {
    %c0_i32 = arith.constant 0 : i32
    %c0_i32_0 = arith.constant 0 : i32
    %c0_i32_1 = arith.constant 0 : i32
    return %c0_i32, %c0_i32_0, %arg0 : i32, i32, i32
  }
  func.func @transform_2(%arg0: i32) -> (i32, i32) {
    %c0_i32 = arith.constant 0 : i32
    %c0_i32_0 = arith.constant 0 : i32
    return %c0_i32, %arg0 : i32, i32
  }
  func.func @transform_3(%arg0: i32) -> (i32, i32) {
    %c0_i32 = arith.constant 0 : i32
    %c0_i32_0 = arith.constant 0 : i32
    return %c0_i32, %arg0 : i32, i32
  }
}

</mosaic_0001>

<llo_original>
// kernel: tpu_custom_call.1
$region0: #{tpu_custom_call.1}
  #allocation0 [shape = 'u32[]', space=smem, size = 0x4, offset = 0x4, fixed_abs, tag = 'smem constant byte address 0x4 - core index']
  #allocation1 [shape = 'u32[144,128]{1,0:T(1,128)}', space=vmem, size = 0x12000, scoped, tag = 'internal scratch']
  #allocation2 [shape = 'f32[1]{0:T(128)S(6)}', space=smem, size = 0x200, scoped, tag = 'scoped memory for tpu_custom_call.1']
  %s0 = inlined_call_operand.<no memory space> [shape: f32[1], index: 0, kind: input, shape index: {}]
  %s1 = inlined_call_operand.hbm [shape: f32[4,16,256], index: 1, kind: input, shape index: {}]
  %s2 = inlined_call_operand.hbm [shape: f32[16,256], index: 2, kind: input, shape index: {}]
  %s3 = inlined_call_operand.hbm [shape: f32[16,256], index: 3, kind: output, shape index: {}]
  %s4 = sld [smem:[#allocation0]]
  $region53: #{tpu_custom_call.1} parent=0
    _
  %s6 = ssub.s32 1, %s4
  %s7 = scalar_select 0, %s6, %s4
  %8 = sst [smem:[#allocation2]] %s0
  $region1: #{tpu_custom_call.1} parent=0
    #allocation3 [shape = 'u8[65536]{0}', space=vmem, size = 0x10000, scoped, tag = 'input window, operand 1']
    #allocation4 [shape = 's32[2]{0}', space=sflag, size = 0x8, scoped, tag = 'scoped memory for tpu_custom_call.1']
    #allocation5 [shape = 's32[2]{0}', space=sflag, size = 0x8, scoped, tag = 'scoped memory for tpu_custom_call.1']
    #allocation6 [shape = 'u8[16384]{0}', space=vmem, size = 0x4000, scoped, tag = 'input window, operand 2']
    #allocation7 [shape = 's32[2]{0}', space=sflag, size = 0x8, scoped, tag = 'scoped memory for tpu_custom_call.1']
    #allocation8 [shape = 'u8[16384]{0}', space=vmem, size = 0x4000, scoped, tag = 'output window, operand 0']
    %9 = vsyncpa [#allocation4], 0
    %s10 = scalar_lea.sflag [#allocation4], 1
    %11 = vsyncpa %s10, 0
    %12 = vsyncpa [#allocation7], 0
    %s13 = scalar_lea.sflag [#allocation7], 1
    %14 = vsyncpa %s13, 0
    %15 = vsyncpa [#allocation5], 0
    %s16 = scalar_lea.sflag [#allocation5], 1
    %17 = vsyncpa %s16, 0
    loop: start=0, step=1, limit=4
    $region2: #{tpu_custom_call.1} parent=1 // loop_pre_header
      _
    $region3: #{tpu_custom_call.1} parent=1 // loop_header
      %s19 = sphi 0, %s23
      %p20 = scmp.ge.s32.totalorder %s19, 4
      %s27 = sphi 0, %s27
      %s29 = sphi 0, %s27
      %s30 = sphi 0, %s29
      %s44 = sphi 0, %s30
      %s50 = sphi 0, %s52
      %s53 = sphi 0, %s50
      %s54 = sphi 0, %s53
      %s70 = sphi 0, %s54
      %s76 = sphi 0, %s78
      %s79 = sphi 0, %s76
      %s80 = sphi 0, %s79
      %s96 = sphi 0, %s80
      %s102 = sphi 0, %s104
      %s105 = sphi 0, %s102
      %s106 = sphi 0, %s105
      %s122 = sphi 0, %s106
    $region4: #{tpu_custom_call.1} parent=1 // loop_header_branch
      %22 = sbr.rel (%p20) target = $region8
    $region5: #{tpu_custom_call.1} parent=1 // loop_body
      %s24 = ssub.s32 %s19, 1
      %s25 = ssub.s32 %s19, 2
      %s26 = sadd.s32 %s19, 1
      %s28 = sadd.s32 %s27, 1
      %p31 = scmp.eq.s32.totalorder %s19, 1
      %p32 = scmp.ne.s32.totalorder %s27, %s29
      %p33 = scmp.eq.s32.totalorder %s19, 0
      %p34 = por %p32, %p33
      %p35 = scmp.ne.s32.totalorder %s27, %s29
      %p36 = scmp.eq.s32.totalorder %s24, 1
      %p37 = por %p35, %p36
      %p38 = scmp.ne.s32.totalorder %s29, %s30
      %p39 = scmp.eq.s32.totalorder %s24, 0
      %p40 = por %p38, %p39
      %p41 = scmp.ne.s32.totalorder %s29, %s30
      %p42 = scmp.eq.s32.totalorder %s25, 1
      %p43 = por %p41, %p42
      %p45 = scmp.ne.s32.totalorder %s30, %s44
      %p46 = scmp.eq.s32.totalorder %s25, 0
      %p47 = por %p45, %p46
      %s48 = ssub.s32 %s19, %s26
      %p49 = scmp.eq.s32.totalorder %s48, 0
      %s51 = sadd.s32 %s50, 1
      %s52 = scalar_select %p49, %s50, %s51
      %p55 = pneg %p49
      %p56 = scmp.eq.s32.totalorder %s19, 1
      %p57 = por %p55, %p56
      %p58 = scmp.ne.s32.totalorder %s50, %s53
      %p59 = scmp.eq.s32.totalorder %s19, 0
      %p60 = por %p58, %p59
      %p61 = scmp.ne.s32.totalorder %s50, %s53
      %p62 = scmp.eq.s32.totalorder %s24, 1
      %p63 = por %p61, %p62
      %p64 = scmp.ne.s32.totalorder %s53, %s54
      %p65 = scmp.eq.s32.totalorder %s24, 0
      %p66 = por %p64, %p65
      %p67 = scmp.ne.s32.totalorder %s53, %s54
      %p68 = scmp.eq.s32.totalorder %s25, 1
      %p69 = por %p67, %p68
      %p71 = scmp.ne.s32.totalorder %s54, %s70
      %p72 = scmp.eq.s32.totalorder %s25, 0
      %p73 = por %p71, %p72
      %s74 = ssub.s32 %s19, %s26
      %p75 = scmp.eq.s32.totalorder %s74, 0
      %s77 = sadd.s32 %s76, 1
      %s78 = scalar_select %p75, %s76, %s77
      %p81 = pneg %p75
      %p82 = scmp.eq.s32.totalorder %s19, 1
      %p83 = por %p81, %p82
      %p84 = scmp.ne.s32.totalorder %s76, %s79
      %p85 = scmp.eq.s32.totalorder %s19, 0
      %p86 = por %p84, %p85
      %p87 = scmp.ne.s32.totalorder %s76, %s79
      %p88 = scmp.eq.s32.totalorder %s24, 1
      %p89 = por %p87, %p88
      %p90 = scmp.ne.s32.totalorder %s79, %s80
      %p91 = scmp.eq.s32.totalorder %s24, 0
      %p92 = por %p90, %p91
      %p93 = scmp.ne.s32.totalorder %s79, %s80
      %p94 = scmp.eq.s32.totalorder %s25, 1
      %p95 = por %p93, %p94
      %p97 = scmp.ne.s32.totalorder %s80, %s96
      %p98 = scmp.eq.s32.totalorder %s25, 0
      %p99 = por %p97, %p98
      %s100 = ssub.s32 %s19, %s26
      %p101 = scmp.eq.s32.totalorder %s100, 0
      %s103 = sadd.s32 %s102, 1
      %s104 = scalar_select %p101, %s102, %s103
      %p107 = pneg %p101
      %p108 = scmp.eq.s32.totalorder %s19, 1
      %p109 = por %p107, %p108
      %p110 = scmp.ne.s32.totalorder %s102, %s105
      %p111 = scmp.eq.s32.totalorder %s19, 0
      %p112 = por %p110, %p111
      %p113 = scmp.ne.s32.totalorder %s102, %s105
      %p114 = scmp.eq.s32.totalorder %s24, 1
      %p115 = por %p113, %p114
      %p116 = scmp.ne.s32.totalorder %s105, %s106
      %p117 = scmp.eq.s32.totalorder %s24, 0
      %p118 = por %p116, %p117
      %p119 = scmp.ne.s32.totalorder %s105, %s106
      %p120 = scmp.eq.s32.totalorder %s25, 1
      %p121 = por %p119, %p120
      %p123 = scmp.ne.s32.totalorder %s106, %s122
      %p124 = scmp.eq.s32.totalorder %s25, 0
      %p125 = por %p123, %p124
      %p126 = scmp.le.s32.totalorder 1, %s19
      %p127 = scmp.lt.s32.totalorder %s19, 3
      %p128 = pnand %p126, %p127
      %p129 = pneg %p128
      // Predicated region
      $region9: #{tpu_custom_call.1} parent=5 // pred_check
        _
      $region10: #{tpu_custom_call.1} parent=5 // pred_check_branch
        %131 = sbr.rel (%p128) target = $region12
      $region11: #{tpu_custom_call.1} parent=5 // pred_region
        %s132 = ssub.s32 %s19, 1
        // Predicated region
        $region13: #{tpu_custom_call.1} parent=11 // pred_check
          %p133 = pneg %p40
        $region14: #{tpu_custom_call.1} parent=11 // pred_check_branch
          %135 = sbr.rel (%p133) target = $region16
        $region15: #{tpu_custom_call.1} parent=11 // pred_region
          _
        $region16: #{tpu_custom_call.1} parent=11 // pred_fallthru
          _
      $region12: #{tpu_custom_call.1} parent=5 // pred_fallthru
        _
      %p136 = scmp.lt.s32.totalorder %s19, 2
      // Predicated region
      $region17: #{tpu_custom_call.1} parent=5 // pred_check
        %p137 = pneg %p136
      $region18: #{tpu_custom_call.1} parent=5 // pred_check_branch
        %139 = sbr.rel (%p137) target = $region20
      $region19: #{tpu_custom_call.1} parent=5 // pred_region
        // Predicated region
        $region21: #{tpu_custom_call.1} parent=19 // pred_check
          %p140 = pneg %p60
        $region22: #{tpu_custom_call.1} parent=19 // pred_check_branch
          %142 = sbr.rel (%p140) target = $region24
        $region23: #{tpu_custom_call.1} parent=19 // pred_region
          %s143 = sand.u32 %s50, 1
          %s144 = scalar_lea.sflag [#allocation4], %s143
          %s145 = sand.u32 %s50, 1
          %s146 = smul.addr %s145, 64
          %s147 = scalar_lea.vmem [#allocation3], %s146
          %s149 = ssub.s32 1024, 1024
          %150 = vsyncadd %s144, %s149
          %s151 = smul.addr %s19, 128
          %s152 = scalar_lea.hbm %s1, %s151
          %s153 = sshll.u32 %s147, 4
          %s154 = int_to_ptr.vmem [resolvable:$true] %s153
          %159 = dma.hbm_to_vmem [thread:$0]  %s152, 1024, %s154, %s144, 256, 128, 8
        $region24: #{tpu_custom_call.1} parent=19 // pred_fallthru
          _
        // Predicated region
        $region25: #{tpu_custom_call.1} parent=19 // pred_check
          %p160 = pneg %p86
        $region26: #{tpu_custom_call.1} parent=19 // pred_check_branch
          %162 = sbr.rel (%p160) target = $region28
        $region27: #{tpu_custom_call.1} parent=19 // pred_region
          %s163 = sand.u32 %s76, 1
          %s164 = scalar_lea.sflag [#allocation7], %s163
          %s165 = sand.u32 %s76, 1
          %s166 = smul.addr %s165, 16
          %s167 = scalar_lea.vmem [#allocation6], %s166
          %s169 = ssub.s32 256, 256
          %170 = vsyncadd %s164, %s169
          %s171 = smul.addr %s19, 128
          %s172 = scalar_lea.hbm %s2, %s171
          %s173 = sshll.u32 %s167, 4
          %s174 = int_to_ptr.vmem [resolvable:$true] %s173
          %179 = dma.hbm_to_vmem [thread:$0]  %s172, 256, %s174, %s164, 256, 128, 8
        $region28: #{tpu_custom_call.1} parent=19 // pred_fallthru
          _
      $region20: #{tpu_custom_call.1} parent=5 // pred_fallthru
        _
      %p180 = scmp.le.s32.totalorder 1, %s19
      %p181 = scmp.lt.s32.totalorder %s19, 3
      %p182 = pnand %p180, %p181
      %p183 = pneg %p182
      // Predicated region
      $region29: #{tpu_custom_call.1} parent=5 // pred_check
        _
      $region30: #{tpu_custom_call.1} parent=5 // pred_check_branch
        %185 = sbr.rel (%p182) target = $region32
      $region31: #{tpu_custom_call.1} parent=5 // pred_region
        %s186 = ssub.s32 %s19, 1
        %s187 = sand.u32 %s53, 1
        %s188 = scalar_lea.sflag [#allocation4], %s187
        %s189 = sand.u32 %s53, 1
        %s190 = smul.addr %s189, 64
        %s191 = scalar_lea.vmem [#allocation3], %s190
        // Predicated region
        $region33: #{tpu_custom_call.1} parent=31 // pred_check
          %p192 = pneg %p66
        $region34: #{tpu_custom_call.1} parent=31 // pred_check_branch
          %194 = sbr.rel (%p192) target = $region36
        $region35: #{tpu_custom_call.1} parent=31 // pred_region
          %195 = dma.done %s188, 1024
        $region36: #{tpu_custom_call.1} parent=31 // pred_fallthru
          _
        %s196 = sand.u32 %s79, 1
        %s197 = scalar_lea.sflag [#allocation7], %s196
        %s198 = sand.u32 %s79, 1
        %s199 = smul.addr %s198, 16
        %s200 = scalar_lea.vmem [#allocation6], %s199
        // Predicated region
        $region37: #{tpu_custom_call.1} parent=31 // pred_check
          %p201 = pneg %p92
        $region38: #{tpu_custom_call.1} parent=31 // pred_check_branch
          %203 = sbr.rel (%p201) target = $region40
        $region39: #{tpu_custom_call.1} parent=31 // pred_region
          %204 = dma.done %s197, 256
        $region40: #{tpu_custom_call.1} parent=31 // pred_fallthru
          _
        %p205 = pneg %p40
        %p206 = pneg %p37
        %s207 = sand.u32 %s53, 1
        %s208 = scalar_lea.sflag [#allocation4], %s207
        %s209 = sand.u32 %s53, 1
        %s210 = smul.addr %s209, 64
        %s211 = scalar_lea.vmem [#allocation3], %s210
        %p212 = pneg %p66
        %p213 = pneg %p63
        %s214 = sand.u32 %s79, 1
        %s215 = scalar_lea.sflag [#allocation7], %s214
        %s216 = sand.u32 %s79, 1
        %s217 = smul.addr %s216, 16
        %s218 = scalar_lea.vmem [#allocation6], %s217
        %p219 = pneg %p92
        %p220 = pneg %p89
        %p221 = pneg %p118
        %p222 = pneg %p115
        %s223 = sand.u32 %s105, 1
        %s224 = scalar_lea.sflag [#allocation5], %s223
        %s225 = sand.u32 %s105, 1
        %s226 = smul.addr %s225, 16
        %s227 = scalar_lea.vmem [#allocation8], %s226
        %v228 = vld [vmem:[%s191] sm:$0xff]
        %v229 = vld [vmem:[%s191 + $0x8] sm:$0xff]
        %v230 = vld [vmem:[%s191 + $0x10] sm:$0xff]
        %v231 = vld [vmem:[%s191 + $0x18] sm:$0xff]
        %v232 = vld [vmem:[%s191 + $0x20] sm:$0xff]
        %v233 = vld [vmem:[%s191 + $0x28] sm:$0xff]
        %v234 = vld [vmem:[%s191 + $0x30] sm:$0xff]
        %v235 = vld [vmem:[%s191 + $0x38] sm:$0xff]
        %v238 = vcombine.high %v228, %v228
        %v240 = vunpack.c.l.s4 1966171168
        %v241 = vunpack.c.0.s8 %v240
        %v242 = vlaneseq
        %v243 = vshrl.u32 %v242, 7
        %v244 = vsub.s32 %v241, %v243
        %v245 = vrot.slane %v228, %v244
        %v247 = vunpack.c.l.s4 1966171168
        %v248 = vunpack.c.0.s8 %v247
        %v249 = vlaneseq
        %v250 = vshrl.u32 %v249, 7
        %v251 = vsub.s32 %v248, %v250
        %v252 = vrot.slane %v238, %v251
        %v253 = vcombine.high %v245, %v245
        %v254 = vcombine.high %v252, %v252
        %v256 = vunpack.c.l.s4 1966171168
        %v257 = vunpack.c.0.s8 %v256
        %v258 = vlaneseq
        %v259 = vshrl.u32 %v258, 7
        %v260 = vsub.s32 %v257, %v259
        %v261 = vrot.slane %v245, %v260
        %v263 = vunpack.c.l.s4 1966171168
        %v264 = vunpack.c.0.s8 %v263
        %v265 = vlaneseq
        %v266 = vshrl.u32 %v265, 7
        %v267 = vsub.s32 %v264, %v266
        %v268 = vrot.slane %v252, %v267
        %v270 = vunpack.c.l.s4 1966171168
        %v271 = vunpack.c.0.s8 %v270
        %v272 = vlaneseq
        %v273 = vshrl.u32 %v272, 7
        %v274 = vsub.s32 %v271, %v273
        %v275 = vrot.slane %v253, %v274
        %v277 = vunpack.c.l.s4 1966171168
        %v278 = vunpack.c.0.s8 %v277
        %v279 = vlaneseq
        %v280 = vshrl.u32 %v279, 7
        %v281 = vsub.s32 %v278, %v280
        %v282 = vrot.slane %v254, %v281
        %v283 = vcombine.high %v261, %v261
        %v284 = vcombine.high %v268, %v268
        %v285 = vcombine.high %v275, %v275
        %v286 = vcombine.high %v282, %v282
        %v287 = vcombine.high %v229, %v229
        %v289 = vunpack.c.l.s4 1966171168
        %v290 = vunpack.c.0.s8 %v289
        %v291 = vlaneseq
        %v292 = vshrl.u32 %v291, 7
        %v293 = vsub.s32 %v290, %v292
        %v294 = vrot.slane %v229, %v293
        %v296 = vunpack.c.l.s4 1966171168
        %v297 = vunpack.c.0.s8 %v296
        %v298 = vlaneseq
        %v299 = vshrl.u32 %v298, 7
        %v300 = vsub.s32 %v297, %v299
        %v301 = vrot.slane %v287, %v300
        %v302 = vcombine.high %v294, %v294
        %v303 = vcombine.high %v301, %v301
        %v305 = vunpack.c.l.s4 1966171168
        %v306 = vunpack.c.0.s8 %v305
        %v307 = vlaneseq
        %v308 = vshrl.u32 %v307, 7
        %v309 = vsub.s32 %v306, %v308
        %v310 = vrot.slane %v294, %v309
        %v312 = vunpack.c.l.s4 1966171168
        %v313 = vunpack.c.0.s8 %v312
        %v314 = vlaneseq
        %v315 = vshrl.u32 %v314, 7
        %v316 = vsub.s32 %v313, %v315
        %v317 = vrot.slane %v301, %v316
        %v319 = vunpack.c.l.s4 1966171168
        %v320 = vunpack.c.0.s8 %v319
        %v321 = vlaneseq
        %v322 = vshrl.u32 %v321, 7
        %v323 = vsub.s32 %v320, %v322
        %v324 = vrot.slane %v302, %v323
        %v326 = vunpack.c.l.s4 1966171168
        %v327 = vunpack.c.0.s8 %v326
        %v328 = vlaneseq
        %v329 = vshrl.u32 %v328, 7
        %v330 = vsub.s32 %v327, %v329
        %v331 = vrot.slane %v303, %v330
        %v332 = vcombine.high %v310, %v310
        %v333 = vcombine.high %v317, %v317
        %v334 = vcombine.high %v324, %v324
        %v335 = vcombine.high %v331, %v331
        %v338 = vcombine.high %v230, %v230
        %v340 = vunpack.c.l.s4 1966171168
        %v341 = vunpack.c.0.s8 %v340
        %v342 = vlaneseq
        %v343 = vshrl.u32 %v342, 7
        %v344 = vsub.s32 %v341, %v343
        %v345 = vrot.slane %v230, %v344
        %v347 = vunpack.c.l.s4 1966171168
        %v348 = vunpack.c.0.s8 %v347
        %v349 = vlaneseq
        %v350 = vshrl.u32 %v349, 7
        %v351 = vsub.s32 %v348, %v350
        %v352 = vrot.slane %v338, %v351
        %v353 = vcombine.high %v345, %v345
        %v354 = vcombine.high %v352, %v352
        %v356 = vunpack.c.l.s4 1966171168
        %v357 = vunpack.c.0.s8 %v356
        %v358 = vlaneseq
        %v359 = vshrl.u32 %v358, 7
        %v360 = vsub.s32 %v357, %v359
        %v361 = vrot.slane %v345, %v360
        %v363 = vunpack.c.l.s4 1966171168
        %v364 = vunpack.c.0.s8 %v363
        %v365 = vlaneseq
        %v366 = vshrl.u32 %v365, 7
        %v367 = vsub.s32 %v364, %v366
        %v368 = vrot.slane %v352, %v367
        %v370 = vunpack.c.l.s4 1966171168
        %v371 = vunpack.c.0.s8 %v370
        %v372 = vlaneseq
        %v373 = vshrl.u32 %v372, 7
        %v374 = vsub.s32 %v371, %v373
        %v375 = vrot.slane %v353, %v374
        %v377 = vunpack.c.l.s4 1966171168
        %v378 = vunpack.c.0.s8 %v377
        %v379 = vlaneseq
        %v380 = vshrl.u32 %v379, 7
        %v381 = vsub.s32 %v378, %v380
        %v382 = vrot.slane %v354, %v381
        %v383 = vcombine.high %v361, %v361
        %v384 = vcombine.high %v368, %v368
        %v385 = vcombine.high %v375, %v375
        %v386 = vcombine.high %v382, %v382
        %v387 = vcombine.high %v231, %v231
        %v389 = vunpack.c.l.s4 1966171168
        %v390 = vunpack.c.0.s8 %v389
        %v391 = vlaneseq
        %v392 = vshrl.u32 %v391, 7
        %v393 = vsub.s32 %v390, %v392
        %v394 = vrot.slane %v231, %v393
        %v396 = vunpack.c.l.s4 1966171168
        %v397 = vunpack.c.0.s8 %v396
        %v398 = vlaneseq
        %v399 = vshrl.u32 %v398, 7
        %v400 = vsub.s32 %v397, %v399
        %v401 = vrot.slane %v387, %v400
        %v402 = vcombine.high %v394, %v394
        %v403 = vcombine.high %v401, %v401
        %v405 = vunpack.c.l.s4 1966171168
        %v406 = vunpack.c.0.s8 %v405
        %v407 = vlaneseq
        %v408 = vshrl.u32 %v407, 7
        %v409 = vsub.s32 %v406, %v408
        %v410 = vrot.slane %v394, %v409
        %v412 = vunpack.c.l.s4 1966171168
        %v413 = vunpack.c.0.s8 %v412
        %v414 = vlaneseq
        %v415 = vshrl.u32 %v414, 7
        %v416 = vsub.s32 %v413, %v415
        %v417 = vrot.slane %v401, %v416
        %v419 = vunpack.c.l.s4 1966171168
        %v420 = vunpack.c.0.s8 %v419
        %v421 = vlaneseq
        %v422 = vshrl.u32 %v421, 7
        %v423 = vsub.s32 %v420, %v422
        %v424 = vrot.slane %v402, %v423
        %v426 = vunpack.c.l.s4 1966171168
        %v427 = vunpack.c.0.s8 %v426
        %v428 = vlaneseq
        %v429 = vshrl.u32 %v428, 7
        %v430 = vsub.s32 %v427, %v429
        %v431 = vrot.slane %v403, %v430
        %v432 = vcombine.high %v410, %v410
        %v433 = vcombine.high %v417, %v417
        %v434 = vcombine.high %v424, %v424
        %v435 = vcombine.high %v431, %v431
        %v438 = vcombine.high %v232, %v232
        %v440 = vunpack.c.l.s4 1966171168
        %v441 = vunpack.c.0.s8 %v440
        %v442 = vlaneseq
        %v443 = vshrl.u32 %v442, 7
        %v444 = vsub.s32 %v441, %v443
        %v445 = vrot.slane %v232, %v444
        %v447 = vunpack.c.l.s4 1966171168
        %v448 = vunpack.c.0.s8 %v447
        %v449 = vlaneseq
        %v450 = vshrl.u32 %v449, 7
        %v451 = vsub.s32 %v448, %v450
        %v452 = vrot.slane %v438, %v451
        %v453 = vcombine.high %v445, %v445
        %v454 = vcombine.high %v452, %v452
        %v456 = vunpack.c.l.s4 1966171168
        %v457 = vunpack.c.0.s8 %v456
        %v458 = vlaneseq
        %v459 = vshrl.u32 %v458, 7
        %v460 = vsub.s32 %v457, %v459
        %v461 = vrot.slane %v445, %v460
        %v463 = vunpack.c.l.s4 1966171168
        %v464 = vunpack.c.0.s8 %v463
        %v465 = vlaneseq
        %v466 = vshrl.u32 %v465, 7
        %v467 = vsub.s32 %v464, %v466
        %v468 = vrot.slane %v452, %v467
        %v470 = vunpack.c.l.s4 1966171168
        %v471 = vunpack.c.0.s8 %v470
        %v472 = vlaneseq
        %v473 = vshrl.u32 %v472, 7
        %v474 = vsub.s32 %v471, %v473
        %v475 = vrot.slane %v453, %v474
        %v477 = vunpack.c.l.s4 1966171168
        %v478 = vunpack.c.0.s8 %v477
        %v479 = vlaneseq
        %v480 = vshrl.u32 %v479, 7
        %v481 = vsub.s32 %v478, %v480
        %v482 = vrot.slane %v454, %v481
        %v483 = vcombine.high %v461, %v461
        %v484 = vcombine.high %v468, %v468
        %v485 = vcombine.high %v475, %v475
        %v486 = vcombine.high %v482, %v482
        %v487 = vcombine.high %v233, %v233
        %v489 = vunpack.c.l.s4 1966171168
        %v490 = vunpack.c.0.s8 %v489
        %v491 = vlaneseq
        %v492 = vshrl.u32 %v491, 7
        %v493 = vsub.s32 %v490, %v492
        %v494 = vrot.slane %v233, %v493
        %v496 = vunpack.c.l.s4 1966171168
        %v497 = vunpack.c.0.s8 %v496
        %v498 = vlaneseq
        %v499 = vshrl.u32 %v498, 7
        %v500 = vsub.s32 %v497, %v499
        %v501 = vrot.slane %v487, %v500
        %v502 = vcombine.high %v494, %v494
        %v503 = vcombine.high %v501, %v501
        %v505 = vunpack.c.l.s4 1966171168
        %v506 = vunpack.c.0.s8 %v505
        %v507 = vlaneseq
        %v508 = vshrl.u32 %v507, 7
        %v509 = vsub.s32 %v506, %v508
        %v510 = vrot.slane %v494, %v509
        %v512 = vunpack.c.l.s4 1966171168
        %v513 = vunpack.c.0.s8 %v512
        %v514 = vlaneseq
        %v515 = vshrl.u32 %v514, 7
        %v516 = vsub.s32 %v513, %v515
        %v517 = vrot.slane %v501, %v516
        %v519 = vunpack.c.l.s4 1966171168
        %v520 = vunpack.c.0.s8 %v519
        %v521 = vlaneseq
        %v522 = vshrl.u32 %v521, 7
        %v523 = vsub.s32 %v520, %v522
        %v524 = vrot.slane %v502, %v523
        %v526 = vunpack.c.l.s4 1966171168
        %v527 = vunpack.c.0.s8 %v526
        %v528 = vlaneseq
        %v529 = vshrl.u32 %v528, 7
        %v530 = vsub.s32 %v527, %v529
        %v531 = vrot.slane %v503, %v530
        %v532 = vcombine.high %v510, %v510
        %v533 = vcombine.high %v517, %v517
        %v534 = vcombine.high %v524, %v524
        %v535 = vcombine.high %v531, %v531
        %v538 = vcombine.high %v234, %v234
        %v540 = vunpack.c.l.s4 1966171168
        %v541 = vunpack.c.0.s8 %v540
        %v542 = vlaneseq
        %v543 = vshrl.u32 %v542, 7
        %v544 = vsub.s32 %v541, %v543
        %v545 = vrot.slane %v234, %v544
        %v547 = vunpack.c.l.s4 1966171168
        %v548 = vunpack.c.0.s8 %v547
        %v549 = vlaneseq
        %v550 = vshrl.u32 %v549, 7
        %v551 = vsub.s32 %v548, %v550
        %v552 = vrot.slane %v538, %v551
        %v553 = vcombine.high %v545, %v545
        %v554 = vcombine.high %v552, %v552
        %v556 = vunpack.c.l.s4 1966171168
        %v557 = vunpack.c.0.s8 %v556
        %v558 = vlaneseq
        %v559 = vshrl.u32 %v558, 7
        %v560 = vsub.s32 %v557, %v559
        %v561 = vrot.slane %v545, %v560
        %v563 = vunpack.c.l.s4 1966171168
        %v564 = vunpack.c.0.s8 %v563
        %v565 = vlaneseq
        %v566 = vshrl.u32 %v565, 7
        %v567 = vsub.s32 %v564, %v566
        %v568 = vrot.slane %v552, %v567
        %v570 = vunpack.c.l.s4 1966171168
        %v571 = vunpack.c.0.s8 %v570
        %v572 = vlaneseq
        %v573 = vshrl.u32 %v572, 7
        %v574 = vsub.s32 %v571, %v573
        %v575 = vrot.slane %v553, %v574
        %v577 = vunpack.c.l.s4 1966171168
        %v578 = vunpack.c.0.s8 %v577
        %v579 = vlaneseq
        %v580 = vshrl.u32 %v579, 7
        %v581 = vsub.s32 %v578, %v580
        %v582 = vrot.slane %v554, %v581
        %v583 = vcombine.high %v561, %v561
        %v584 = vcombine.high %v568, %v568
        %v585 = vcombine.high %v575, %v575
        %v586 = vcombine.high %v582, %v582
        %v587 = vcombine.high %v235, %v235
        %v589 = vunpack.c.l.s4 1966171168
        %v590 = vunpack.c.0.s8 %v589
        %v591 = vlaneseq
        %v592 = vshrl.u32 %v591, 7
        %v593 = vsub.s32 %v590, %v592
        %v594 = vrot.slane %v235, %v593
        %v596 = vunpack.c.l.s4 1966171168
        %v597 = vunpack.c.0.s8 %v596
        %v598 = vlaneseq
        %v599 = vshrl.u32 %v598, 7
        %v600 = vsub.s32 %v597, %v599
        %v601 = vrot.slane %v587, %v600
        %v602 = vcombine.high %v594, %v594
        %v603 = vcombine.high %v601, %v601
        %v605 = vunpack.c.l.s4 1966171168
        %v606 = vunpack.c.0.s8 %v605
        %v607 = vlaneseq
        %v608 = vshrl.u32 %v607, 7
        %v609 = vsub.s32 %v606, %v608
        %v610 = vrot.slane %v594, %v609
        %v612 = vunpack.c.l.s4 1966171168
        %v613 = vunpack.c.0.s8 %v612
        %v614 = vlaneseq
        %v615 = vshrl.u32 %v614, 7
        %v616 = vsub.s32 %v613, %v615
        %v617 = vrot.slane %v601, %v616
        %v619 = vunpack.c.l.s4 1966171168
        %v620 = vunpack.c.0.s8 %v619
        %v621 = vlaneseq
        %v622 = vshrl.u32 %v621, 7
        %v623 = vsub.s32 %v620, %v622
        %v624 = vrot.slane %v602, %v623
        %v626 = vunpack.c.l.s4 1966171168
        %v627 = vunpack.c.0.s8 %v626
        %v628 = vlaneseq
        %v629 = vshrl.u32 %v628, 7
        %v630 = vsub.s32 %v627, %v629
        %v631 = vrot.slane %v603, %v630
        %v632 = vcombine.high %v610, %v610
        %v633 = vcombine.high %v617, %v617
        %v634 = vcombine.high %v624, %v624
        %v635 = vcombine.high %v631, %v631
        %v636 = vlaneseq
        %v637 = vshrl.u32 %v636, 7
        %v638 = vsub.s32 0, %v637
        %v639 = vrot.slane %v361, %v638
        %v640 = vlaneseq
        %v641 = vshrl.u32 %v640, 7
        %v642 = vsub.s32 0, %v641
        %v643 = vrot.slane %v375, %v642
        %v644 = vlaneseq
        %v645 = vshrl.u32 %v644, 7
        %v646 = vsub.s32 0, %v645
        %v647 = vrot.slane %v383, %v646
        %v648 = vlaneseq
        %v649 = vshrl.u32 %v648, 7
        %v650 = vsub.s32 0, %v649
        %v651 = vrot.slane %v385, %v650
        %v652 = vlaneseq
        %v653 = vshrl.u32 %v652, 7
        %v654 = vsub.s32 0, %v653
        %v655 = vrot.slane %v368, %v654
        %v656 = vlaneseq
        %v657 = vshrl.u32 %v656, 7
        %v658 = vsub.s32 0, %v657
        %v659 = vrot.slane %v382, %v658
        %v660 = vlaneseq
        %v661 = vshrl.u32 %v660, 7
        %v662 = vsub.s32 0, %v661
        %v663 = vrot.slane %v384, %v662
        %v664 = vlaneseq
        %v665 = vshrl.u32 %v664, 7
        %v666 = vsub.s32 0, %v665
        %v667 = vrot.slane %v386, %v666
        %v668 = vlaneseq
        %v669 = vshrl.u32 %v668, 7
        %v670 = vsub.s32 0, %v669
        %v671 = vrot.slane %v410, %v670
        %v672 = vlaneseq
        %v673 = vshrl.u32 %v672, 7
        %v674 = vsub.s32 0, %v673
        %v675 = vrot.slane %v424, %v674
        %v676 = vlaneseq
        %v677 = vshrl.u32 %v676, 7
        %v678 = vsub.s32 0, %v677
        %v679 = vrot.slane %v432, %v678
        %v680 = vlaneseq
        %v681 = vshrl.u32 %v680, 7
        %v682 = vsub.s32 0, %v681
        %v683 = vrot.slane %v434, %v682
        %v684 = vlaneseq
        %v685 = vshrl.u32 %v684, 7
        %v686 = vsub.s32 0, %v685
        %v687 = vrot.slane %v417, %v686
        %v688 = vlaneseq
        %v689 = vshrl.u32 %v688, 7
        %v690 = vsub.s32 0, %v689
        %v691 = vrot.slane %v431, %v690
        %v692 = vlaneseq
        %v693 = vshrl.u32 %v692, 7
        %v694 = vsub.s32 0, %v693
        %v695 = vrot.slane %v433, %v694
        %v696 = vlaneseq
        %v697 = vshrl.u32 %v696, 7
        %v698 = vsub.s32 0, %v697
        %v699 = vrot.slane %v435, %v698
        %v716 = vmul.f32 %v639, %v230
        %v717 = vmul.f32 %v639, %v231
        %v718 = vmul.f32 %v643, %v230
        %v719 = vmul.f32 %v643, %v231
        %v720 = vmul.f32 %v647, %v230
        %v721 = vmul.f32 %v647, %v231
        %v722 = vmul.f32 %v651, %v230
        %v723 = vmul.f32 %v651, %v231
        %v724 = vmul.f32 %v655, %v230
        %v725 = vmul.f32 %v655, %v231
        %v726 = vmul.f32 %v659, %v230
        %v727 = vmul.f32 %v659, %v231
        %v728 = vmul.f32 %v663, %v230
        %v729 = vmul.f32 %v663, %v231
        %v730 = vmul.f32 %v667, %v230
        %v731 = vmul.f32 %v667, %v231
        %v732 = vmul.f32 %v671, %v230
        %v733 = vmul.f32 %v671, %v231
        %v734 = vmul.f32 %v675, %v230
        %v735 = vmul.f32 %v675, %v231
        %v736 = vmul.f32 %v679, %v230
        %v737 = vmul.f32 %v679, %v231
        %v738 = vmul.f32 %v683, %v230
        %v739 = vmul.f32 %v683, %v231
        %v740 = vmul.f32 %v687, %v230
        %v741 = vmul.f32 %v687, %v231
        %v742 = vmul.f32 %v691, %v230
        %v743 = vmul.f32 %v691, %v231
        %v744 = vmul.f32 %v695, %v230
        %v745 = vmul.f32 %v695, %v231
        %v746 = vmul.f32 %v699, %v230
        %v747 = vmul.f32 %v699, %v231
        %v748 = vlaneseq
        %v749 = vshrl.u32 %v748, 7
        %v750 = vsub.s32 0, %v749
        %v751 = vrot.slane %v261, %v750
        %v752 = vlaneseq
        %v753 = vshrl.u32 %v752, 7
        %v754 = vsub.s32 0, %v753
        %v755 = vrot.slane %v275, %v754
        %v756 = vlaneseq
        %v757 = vshrl.u32 %v756, 7
        %v758 = vsub.s32 0, %v757
        %v759 = vrot.slane %v283, %v758
        %v760 = vlaneseq
        %v761 = vshrl.u32 %v760, 7
        %v762 = vsub.s32 0, %v761
        %v763 = vrot.slane %v285, %v762
        %v764 = vlaneseq
        %v765 = vshrl.u32 %v764, 7
        %v766 = vsub.s32 0, %v765
        %v767 = vrot.slane %v268, %v766
        %v768 = vlaneseq
        %v769 = vshrl.u32 %v768, 7
        %v770 = vsub.s32 0, %v769
        %v771 = vrot.slane %v282, %v770
        %v772 = vlaneseq
        %v773 = vshrl.u32 %v772, 7
        %v774 = vsub.s32 0, %v773
        %v775 = vrot.slane %v284, %v774
        %v776 = vlaneseq
        %v777 = vshrl.u32 %v776, 7
        %v778 = vsub.s32 0, %v777
        %v779 = vrot.slane %v286, %v778
        %v780 = vlaneseq
        %v781 = vshrl.u32 %v780, 7
        %v782 = vsub.s32 0, %v781
        %v783 = vrot.slane %v310, %v782
        %v784 = vlaneseq
        %v785 = vshrl.u32 %v784, 7
        %v786 = vsub.s32 0, %v785
        %v787 = vrot.slane %v324, %v786
        %v788 = vlaneseq
        %v789 = vshrl.u32 %v788, 7
        %v790 = vsub.s32 0, %v789
        %v791 = vrot.slane %v332, %v790
        %v792 = vlaneseq
        %v793 = vshrl.u32 %v792, 7
        %v794 = vsub.s32 0, %v793
        %v795 = vrot.slane %v334, %v794
        %v796 = vlaneseq
        %v797 = vshrl.u32 %v796, 7
        %v798 = vsub.s32 0, %v797
        %v799 = vrot.slane %v317, %v798
        %v800 = vlaneseq
        %v801 = vshrl.u32 %v800, 7
        %v802 = vsub.s32 0, %v801
        %v803 = vrot.slane %v331, %v802
        %v804 = vlaneseq
        %v805 = vshrl.u32 %v804, 7
        %v806 = vsub.s32 0, %v805
        %v807 = vrot.slane %v333, %v806
        %v808 = vlaneseq
        %v809 = vshrl.u32 %v808, 7
        %v810 = vsub.s32 0, %v809
        %v811 = vrot.slane %v335, %v810
        %v828 = vmul.f32 %v751, %v228
        %v829 = vmul.f32 %v751, %v229
        %v830 = vmul.f32 %v755, %v228
        %v831 = vmul.f32 %v755, %v229
        %v832 = vmul.f32 %v759, %v228
        %v833 = vmul.f32 %v759, %v229
        %v834 = vmul.f32 %v763, %v228
        %v835 = vmul.f32 %v763, %v229
        %v836 = vmul.f32 %v767, %v228
        %v837 = vmul.f32 %v767, %v229
        %v838 = vmul.f32 %v771, %v228
        %v839 = vmul.f32 %v771, %v229
        %v840 = vmul.f32 %v775, %v228
        %v841 = vmul.f32 %v775, %v229
        %v842 = vmul.f32 %v779, %v228
        %v843 = vmul.f32 %v779, %v229
        %v844 = vmul.f32 %v783, %v228
        %v845 = vmul.f32 %v783, %v229
        %v846 = vmul.f32 %v787, %v228
        %v847 = vmul.f32 %v787, %v229
        %v848 = vmul.f32 %v791, %v228
        %v849 = vmul.f32 %v791, %v229
        %v850 = vmul.f32 %v795, %v228
        %v851 = vmul.f32 %v795, %v229
        %v852 = vmul.f32 %v799, %v228
        %v853 = vmul.f32 %v799, %v229
        %v854 = vmul.f32 %v803, %v228
        %v855 = vmul.f32 %v803, %v229
        %v856 = vmul.f32 %v807, %v228
        %v857 = vmul.f32 %v807, %v229
        %v858 = vmul.f32 %v811, %v228
        %v859 = vmul.f32 %v811, %v229
        %v860 = vadd.f32 %v716, %v828
        %v861 = vadd.f32 %v717, %v829
        %v862 = vadd.f32 %v718, %v830
        %v863 = vadd.f32 %v719, %v831
        %v864 = vadd.f32 %v720, %v832
        %v865 = vadd.f32 %v721, %v833
        %v866 = vadd.f32 %v722, %v834
        %v867 = vadd.f32 %v723, %v835
        %v868 = vadd.f32 %v724, %v836
        %v869 = vadd.f32 %v725, %v837
        %v870 = vadd.f32 %v726, %v838
        %v871 = vadd.f32 %v727, %v839
        %v872 = vadd.f32 %v728, %v840
        %v873 = vadd.f32 %v729, %v841
        %v874 = vadd.f32 %v730, %v842
        %v875 = vadd.f32 %v731, %v843
        %v876 = vadd.f32 %v732, %v844
        %v877 = vadd.f32 %v733, %v845
        %v878 = vadd.f32 %v734, %v846
        %v879 = vadd.f32 %v735, %v847
        %v880 = vadd.f32 %v736, %v848
        %v881 = vadd.f32 %v737, %v849
        %v882 = vadd.f32 %v738, %v850
        %v883 = vadd.f32 %v739, %v851
        %v884 = vadd.f32 %v740, %v852
        %v885 = vadd.f32 %v741, %v853
        %v886 = vadd.f32 %v742, %v854
        %v887 = vadd.f32 %v743, %v855
        %v888 = vadd.f32 %v744, %v856
        %v889 = vadd.f32 %v745, %v857
        %v890 = vadd.f32 %v746, %v858
        %v891 = vadd.f32 %v747, %v859
        %v892 = vlaneseq
        %v893 = vshrl.u32 %v892, 7
        %v894 = vsub.s32 0, %v893
        %v895 = vrot.slane %v561, %v894
        %v896 = vlaneseq
        %v897 = vshrl.u32 %v896, 7
        %v898 = vsub.s32 0, %v897
        %v899 = vrot.slane %v575, %v898
        %v900 = vlaneseq
        %v901 = vshrl.u32 %v900, 7
        %v902 = vsub.s32 0, %v901
        %v903 = vrot.slane %v583, %v902
        %v904 = vlaneseq
        %v905 = vshrl.u32 %v904, 7
        %v906 = vsub.s32 0, %v905
        %v907 = vrot.slane %v585, %v906
        %v908 = vlaneseq
        %v909 = vshrl.u32 %v908, 7
        %v910 = vsub.s32 0, %v909
        %v911 = vrot.slane %v568, %v910
        %v912 = vlaneseq
        %v913 = vshrl.u32 %v912, 7
        %v914 = vsub.s32 0, %v913
        %v915 = vrot.slane %v582, %v914
        %v916 = vlaneseq
        %v917 = vshrl.u32 %v916, 7
        %v918 = vsub.s32 0, %v917
        %v919 = vrot.slane %v584, %v918
        %v920 = vlaneseq
        %v921 = vshrl.u32 %v920, 7
        %v922 = vsub.s32 0, %v921
        %v923 = vrot.slane %v586, %v922
        %v924 = vlaneseq
        %v925 = vshrl.u32 %v924, 7
        %v926 = vsub.s32 0, %v925
        %v927 = vrot.slane %v610, %v926
        %v928 = vlaneseq
        %v929 = vshrl.u32 %v928, 7
        %v930 = vsub.s32 0, %v929
        %v931 = vrot.slane %v624, %v930
        %v932 = vlaneseq
        %v933 = vshrl.u32 %v932, 7
        %v934 = vsub.s32 0, %v933
        %v935 = vrot.slane %v632, %v934
        %v936 = vlaneseq
        %v937 = vshrl.u32 %v936, 7
        %v938 = vsub.s32 0, %v937
        %v939 = vrot.slane %v634, %v938
        %v940 = vlaneseq
        %v941 = vshrl.u32 %v940, 7
        %v942 = vsub.s32 0, %v941
        %v943 = vrot.slane %v617, %v942
        %v944 = vlaneseq
        %v945 = vshrl.u32 %v944, 7
        %v946 = vsub.s32 0, %v945
        %v947 = vrot.slane %v631, %v946
        %v948 = vlaneseq
        %v949 = vshrl.u32 %v948, 7
        %v950 = vsub.s32 0, %v949
        %v951 = vrot.slane %v633, %v950
        %v952 = vlaneseq
        %v953 = vshrl.u32 %v952, 7
        %v954 = vsub.s32 0, %v953
        %v955 = vrot.slane %v635, %v954
        %v972 = vmul.f32 %v895, %v234
        %v973 = vmul.f32 %v895, %v235
        %v974 = vmul.f32 %v899, %v234
        %v975 = vmul.f32 %v899, %v235
        %v976 = vmul.f32 %v903, %v234
        %v977 = vmul.f32 %v903, %v235
        %v978 = vmul.f32 %v907, %v234
        %v979 = vmul.f32 %v907, %v235
        %v980 = vmul.f32 %v911, %v234
        %v981 = vmul.f32 %v911, %v235
        %v982 = vmul.f32 %v915, %v234
        %v983 = vmul.f32 %v915, %v235
        %v984 = vmul.f32 %v919, %v234
        %v985 = vmul.f32 %v919, %v235
        %v986 = vmul.f32 %v923, %v234
        %v987 = vmul.f32 %v923, %v235
        %v988 = vmul.f32 %v927, %v234
        %v989 = vmul.f32 %v927, %v235
        %v990 = vmul.f32 %v931, %v234
        %v991 = vmul.f32 %v931, %v235
        %v992 = vmul.f32 %v935, %v234
        %v993 = vmul.f32 %v935, %v235
        %v994 = vmul.f32 %v939, %v234
        %v995 = vmul.f32 %v939, %v235
        %v996 = vmul.f32 %v943, %v234
        %v997 = vmul.f32 %v943, %v235
        %v998 = vmul.f32 %v947, %v234
        %v999 = vmul.f32 %v947, %v235
        %v1000 = vmul.f32 %v951, %v234
        %v1001 = vmul.f32 %v951, %v235
        %v1002 = vmul.f32 %v955, %v234
        %v1003 = vmul.f32 %v955, %v235
        %v1004 = vlaneseq
        %v1005 = vshrl.u32 %v1004, 7
        %v1006 = vsub.s32 0, %v1005
        %v1007 = vrot.slane %v461, %v1006
        %v1008 = vlaneseq
        %v1009 = vshrl.u32 %v1008, 7
        %v1010 = vsub.s32 0, %v1009
        %v1011 = vrot.slane %v475, %v1010
        %v1012 = vlaneseq
        %v1013 = vshrl.u32 %v1012, 7
        %v1014 = vsub.s32 0, %v1013
        %v1015 = vrot.slane %v483, %v1014
        %v1016 = vlaneseq
        %v1017 = vshrl.u32 %v1016, 7
        %v1018 = vsub.s32 0, %v1017
        %v1019 = vrot.slane %v485, %v1018
        %v1020 = vlaneseq
        %v1021 = vshrl.u32 %v1020, 7
        %v1022 = vsub.s32 0, %v1021
        %v1023 = vrot.slane %v468, %v1022
        %v1024 = vlaneseq
        %v1025 = vshrl.u32 %v1024, 7
        %v1026 = vsub.s32 0, %v1025
        %v1027 = vrot.slane %v482, %v1026
        %v1028 = vlaneseq
        %v1029 = vshrl.u32 %v1028, 7
        %v1030 = vsub.s32 0, %v1029
        %v1031 = vrot.slane %v484, %v1030
        %v1032 = vlaneseq
        %v1033 = vshrl.u32 %v1032, 7
        %v1034 = vsub.s32 0, %v1033
        %v1035 = vrot.slane %v486, %v1034
        %v1036 = vlaneseq
        %v1037 = vshrl.u32 %v1036, 7
        %v1038 = vsub.s32 0, %v1037
        %v1039 = vrot.slane %v510, %v1038
        %v1040 = vlaneseq
        %v1041 = vshrl.u32 %v1040, 7
        %v1042 = vsub.s32 0, %v1041
        %v1043 = vrot.slane %v524, %v1042
        %v1044 = vlaneseq
        %v1045 = vshrl.u32 %v1044, 7
        %v1046 = vsub.s32 0, %v1045
        %v1047 = vrot.slane %v532, %v1046
        %v1048 = vlaneseq
        %v1049 = vshrl.u32 %v1048, 7
        %v1050 = vsub.s32 0, %v1049
        %v1051 = vrot.slane %v534, %v1050
        %v1052 = vlaneseq
        %v1053 = vshrl.u32 %v1052, 7
        %v1054 = vsub.s32 0, %v1053
        %v1055 = vrot.slane %v517, %v1054
        %v1056 = vlaneseq
        %v1057 = vshrl.u32 %v1056, 7
        %v1058 = vsub.s32 0, %v1057
        %v1059 = vrot.slane %v531, %v1058
        %v1060 = vlaneseq
        %v1061 = vshrl.u32 %v1060, 7
        %v1062 = vsub.s32 0, %v1061
        %v1063 = vrot.slane %v533, %v1062
        %v1064 = vlaneseq
        %v1065 = vshrl.u32 %v1064, 7
        %v1066 = vsub.s32 0, %v1065
        %v1067 = vrot.slane %v535, %v1066
        %v1084 = vmul.f32 %v1007, %v232
        %v1085 = vmul.f32 %v1007, %v233
        %v1086 = vmul.f32 %v1011, %v232
        %v1087 = vmul.f32 %v1011, %v233
        %v1088 = vmul.f32 %v1015, %v232
        %v1089 = vmul.f32 %v1015, %v233
        %v1090 = vmul.f32 %v1019, %v232
        %v1091 = vmul.f32 %v1019, %v233
        %v1092 = vmul.f32 %v1023, %v232
        %v1093 = vmul.f32 %v1023, %v233
        %v1094 = vmul.f32 %v1027, %v232
        %v1095 = vmul.f32 %v1027, %v233
        %v1096 = vmul.f32 %v1031, %v232
        %v1097 = vmul.f32 %v1031, %v233
        %v1098 = vmul.f32 %v1035, %v232
        %v1099 = vmul.f32 %v1035, %v233
        %v1100 = vmul.f32 %v1039, %v232
        %v1101 = vmul.f32 %v1039, %v233
        %v1102 = vmul.f32 %v1043, %v232
        %v1103 = vmul.f32 %v1043, %v233
        %v1104 = vmul.f32 %v1047, %v232
        %v1105 = vmul.f32 %v1047, %v233
        %v1106 = vmul.f32 %v1051, %v232
        %v1107 = vmul.f32 %v1051, %v233
        %v1108 = vmul.f32 %v1055, %v232
        %v1109 = vmul.f32 %v1055, %v233
        %v1110 = vmul.f32 %v1059, %v232
        %v1111 = vmul.f32 %v1059, %v233
        %v1112 = vmul.f32 %v1063, %v232
        %v1113 = vmul.f32 %v1063, %v233
        %v1114 = vmul.f32 %v1067, %v232
        %v1115 = vmul.f32 %v1067, %v233
        %v1116 = vadd.f32 %v972, %v1084
        %v1117 = vadd.f32 %v973, %v1085
        %v1118 = vadd.f32 %v974, %v1086
        %v1119 = vadd.f32 %v975, %v1087
        %v1120 = vadd.f32 %v976, %v1088
        %v1121 = vadd.f32 %v977, %v1089
        %v1122 = vadd.f32 %v978, %v1090
        %v1123 = vadd.f32 %v979, %v1091
        %v1124 = vadd.f32 %v980, %v1092
        %v1125 = vadd.f32 %v981, %v1093
        %v1126 = vadd.f32 %v982, %v1094
        %v1127 = vadd.f32 %v983, %v1095
        %v1128 = vadd.f32 %v984, %v1096
        %v1129 = vadd.f32 %v985, %v1097
        %v1130 = vadd.f32 %v986, %v1098
        %v1131 = vadd.f32 %v987, %v1099
        %v1132 = vadd.f32 %v988, %v1100
        %v1133 = vadd.f32 %v989, %v1101
        %v1134 = vadd.f32 %v990, %v1102
        %v1135 = vadd.f32 %v991, %v1103
        %v1136 = vadd.f32 %v992, %v1104
        %v1137 = vadd.f32 %v993, %v1105
        %v1138 = vadd.f32 %v994, %v1106
        %v1139 = vadd.f32 %v995, %v1107
        %v1140 = vadd.f32 %v996, %v1108
        %v1141 = vadd.f32 %v997, %v1109
        %v1142 = vadd.f32 %v998, %v1110
        %v1143 = vadd.f32 %v999, %v1111
        %v1144 = vadd.f32 %v1000, %v1112
        %v1145 = vadd.f32 %v1001, %v1113
        %v1146 = vadd.f32 %v1002, %v1114
        %v1147 = vadd.f32 %v1003, %v1115
        %v1148 = vsub.f32 1.0, %v860
        %v1149 = vsub.f32 1.0, %v861
        %v1150 = vsub.f32 1.0, %v862
        %v1151 = vsub.f32 1.0, %v863
        %v1152 = vsub.f32 1.0, %v864
        %v1153 = vsub.f32 1.0, %v865
        %v1154 = vsub.f32 1.0, %v866
        %v1155 = vsub.f32 1.0, %v867
        %v1156 = vsub.f32 1.0, %v868
        %v1157 = vsub.f32 1.0, %v869
        %v1158 = vsub.f32 1.0, %v870
        %v1159 = vsub.f32 1.0, %v871
        %v1160 = vsub.f32 1.0, %v872
        %v1161 = vsub.f32 1.0, %v873
        %v1162 = vsub.f32 1.0, %v874
        %v1163 = vsub.f32 1.0, %v875
        %v1164 = vsub.f32 1.0, %v876
        %v1165 = vsub.f32 1.0, %v877
        %v1166 = vsub.f32 1.0, %v878
        %v1167 = vsub.f32 1.0, %v879
        %v1168 = vsub.f32 1.0, %v880
        %v1169 = vsub.f32 1.0, %v881
        %v1170 = vsub.f32 1.0, %v882
        %v1171 = vsub.f32 1.0, %v883
        %v1172 = vsub.f32 1.0, %v884
        %v1173 = vsub.f32 1.0, %v885
        %v1174 = vsub.f32 1.0, %v886
        %v1175 = vsub.f32 1.0, %v887
        %v1176 = vsub.f32 1.0, %v888
        %v1177 = vsub.f32 1.0, %v889
        %v1178 = vsub.f32 1.0, %v890
        %v1179 = vsub.f32 1.0, %v891
        %v1180 = vsub.f32 1.0, %v1116
        %v1181 = vsub.f32 1.0, %v1117
        %v1182 = vsub.f32 1.0, %v1118
        %v1183 = vsub.f32 1.0, %v1119
        %v1184 = vsub.f32 1.0, %v1120
        %v1185 = vsub.f32 1.0, %v1121
        %v1186 = vsub.f32 1.0, %v1122
        %v1187 = vsub.f32 1.0, %v1123
        %v1188 = vsub.f32 1.0, %v1124
        %v1189 = vsub.f32 1.0, %v1125
        %v1190 = vsub.f32 1.0, %v1126
        %v1191 = vsub.f32 1.0, %v1127
        %v1192 = vsub.f32 1.0, %v1128
        %v1193 = vsub.f32 1.0, %v1129
        %v1194 = vsub.f32 1.0, %v1130
        %v1195 = vsub.f32 1.0, %v1131
        %v1196 = vsub.f32 1.0, %v1132
        %v1197 = vsub.f32 1.0, %v1133
        %v1198 = vsub.f32 1.0, %v1134
        %v1199 = vsub.f32 1.0, %v1135
        %v1200 = vsub.f32 1.0, %v1136
        %v1201 = vsub.f32 1.0, %v1137
        %v1202 = vsub.f32 1.0, %v1138
        %v1203 = vsub.f32 1.0, %v1139
        %v1204 = vsub.f32 1.0, %v1140
        %v1205 = vsub.f32 1.0, %v1141
        %v1206 = vsub.f32 1.0, %v1142
        %v1207 = vsub.f32 1.0, %v1143
        %v1208 = vsub.f32 1.0, %v1144
        %v1209 = vsub.f32 1.0, %v1145
        %v1210 = vsub.f32 1.0, %v1146
        %v1211 = vsub.f32 1.0, %v1147
        %v1212 = vmul.f32 %v716, %v1180
        %v1213 = vmul.f32 %v717, %v1181
        %v1214 = vmul.f32 %v718, %v1182
        %v1215 = vmul.f32 %v719, %v1183
        %v1216 = vmul.f32 %v720, %v1184
        %v1217 = vmul.f32 %v721, %v1185
        %v1218 = vmul.f32 %v722, %v1186
        %v1219 = vmul.f32 %v723, %v1187
        %v1220 = vmul.f32 %v724, %v1188
        %v1221 = vmul.f32 %v725, %v1189
        %v1222 = vmul.f32 %v726, %v1190
        %v1223 = vmul.f32 %v727, %v1191
        %v1224 = vmul.f32 %v728, %v1192
        %v1225 = vmul.f32 %v729, %v1193
        %v1226 = vmul.f32 %v730, %v1194
        %v1227 = vmul.f32 %v731, %v1195
        %v1228 = vmul.f32 %v732, %v1196
        %v1229 = vmul.f32 %v733, %v1197
        %v1230 = vmul.f32 %v734, %v1198
        %v1231 = vmul.f32 %v735, %v1199
        %v1232 = vmul.f32 %v736, %v1200
        %v1233 = vmul.f32 %v737, %v1201
        %v1234 = vmul.f32 %v738, %v1202
        %v1235 = vmul.f32 %v739, %v1203
        %v1236 = vmul.f32 %v740, %v1204
        %v1237 = vmul.f32 %v741, %v1205
        %v1238 = vmul.f32 %v742, %v1206
        %v1239 = vmul.f32 %v743, %v1207
        %v1240 = vmul.f32 %v744, %v1208
        %v1241 = vmul.f32 %v745, %v1209
        %v1242 = vmul.f32 %v746, %v1210
        %v1243 = vmul.f32 %v747, %v1211
        %v1244 = vadd.f32 %v1148, %v1212
        %v1245 = vadd.f32 %v1149, %v1213
        %v1246 = vadd.f32 %v1150, %v1214
        %v1247 = vadd.f32 %v1151, %v1215
        %v1248 = vadd.f32 %v1152, %v1216
        %v1249 = vadd.f32 %v1153, %v1217
        %v1250 = vadd.f32 %v1154, %v1218
        %v1251 = vadd.f32 %v1155, %v1219
        %v1252 = vadd.f32 %v1156, %v1220
        %v1253 = vadd.f32 %v1157, %v1221
        %v1254 = vadd.f32 %v1158, %v1222
        %v1255 = vadd.f32 %v1159, %v1223
        %v1256 = vadd.f32 %v1160, %v1224
        %v1257 = vadd.f32 %v1161, %v1225
        %v1258 = vadd.f32 %v1162, %v1226
        %v1259 = vadd.f32 %v1163, %v1227
        %v1260 = vadd.f32 %v1164, %v1228
        %v1261 = vadd.f32 %v1165, %v1229
        %v1262 = vadd.f32 %v1166, %v1230
        %v1263 = vadd.f32 %v1167, %v1231
        %v1264 = vadd.f32 %v1168, %v1232
        %v1265 = vadd.f32 %v1169, %v1233
        %v1266 = vadd.f32 %v1170, %v1234
        %v1267 = vadd.f32 %v1171, %v1235
        %v1268 = vadd.f32 %v1172, %v1236
        %v1269 = vadd.f32 %v1173, %v1237
        %v1270 = vadd.f32 %v1174, %v1238
        %v1271 = vadd.f32 %v1175, %v1239
        %v1272 = vadd.f32 %v1176, %v1240
        %v1273 = vadd.f32 %v1177, %v1241
        %v1274 = vadd.f32 %v1178, %v1242
        %v1275 = vadd.f32 %v1179, %v1243
        %v1276 = vmul.f32 %v1244, 0.5
        %v1277 = vmul.f32 %v1245, 0.5
        %v1278 = vmul.f32 %v1246, 0.5
        %v1279 = vmul.f32 %v1247, 0.5
        %v1280 = vmul.f32 %v1248, 0.5
        %v1281 = vmul.f32 %v1249, 0.5
        %v1282 = vmul.f32 %v1250, 0.5
        %v1283 = vmul.f32 %v1251, 0.5
        %v1284 = vmul.f32 %v1252, 0.5
        %v1285 = vmul.f32 %v1253, 0.5
        %v1286 = vmul.f32 %v1254, 0.5
        %v1287 = vmul.f32 %v1255, 0.5
        %v1288 = vmul.f32 %v1256, 0.5
        %v1289 = vmul.f32 %v1257, 0.5
        %v1290 = vmul.f32 %v1258, 0.5
        %v1291 = vmul.f32 %v1259, 0.5
        %v1292 = vmul.f32 %v1260, 0.5
        %v1293 = vmul.f32 %v1261, 0.5
        %v1294 = vmul.f32 %v1262, 0.5
        %v1295 = vmul.f32 %v1263, 0.5
        %v1296 = vmul.f32 %v1264, 0.5
        %v1297 = vmul.f32 %v1265, 0.5
        %v1298 = vmul.f32 %v1266, 0.5
        %v1299 = vmul.f32 %v1267, 0.5
        %v1300 = vmul.f32 %v1268, 0.5
        %v1301 = vmul.f32 %v1269, 0.5
        %v1302 = vmul.f32 %v1270, 0.5
        %v1303 = vmul.f32 %v1271, 0.5
        %v1304 = vmul.f32 %v1272, 0.5
        %v1305 = vmul.f32 %v1273, 0.5
        %v1306 = vmul.f32 %v1274, 0.5
        %v1307 = vmul.f32 %v1275, 0.5
        %v1308 = vmax.f32 %v1276, 0.0
        %v1309 = vmax.f32 %v1277, 0.0
        %v1310 = vmax.f32 %v1278, 0.0
        %v1311 = vmax.f32 %v1279, 0.0
        %v1312 = vmax.f32 %v1280, 0.0
        %v1313 = vmax.f32 %v1281, 0.0
        %v1314 = vmax.f32 %v1282, 0.0
        %v1315 = vmax.f32 %v1283, 0.0
        %v1316 = vmax.f32 %v1284, 0.0
        %v1317 = vmax.f32 %v1285, 0.0
        %v1318 = vmax.f32 %v1286, 0.0
        %v1319 = vmax.f32 %v1287, 0.0
        %v1320 = vmax.f32 %v1288, 0.0
        %v1321 = vmax.f32 %v1289, 0.0
        %v1322 = vmax.f32 %v1290, 0.0
        %v1323 = vmax.f32 %v1291, 0.0
        %v1324 = vmax.f32 %v1292, 0.0
        %v1325 = vmax.f32 %v1293, 0.0
        %v1326 = vmax.f32 %v1294, 0.0
        %v1327 = vmax.f32 %v1295, 0.0
        %v1328 = vmax.f32 %v1296, 0.0
        %v1329 = vmax.f32 %v1297, 0.0
        %v1330 = vmax.f32 %v1298, 0.0
        %v1331 = vmax.f32 %v1299, 0.0
        %v1332 = vmax.f32 %v1300, 0.0
        %v1333 = vmax.f32 %v1301, 0.0
        %v1334 = vmax.f32 %v1302, 0.0
        %v1335 = vmax.f32 %v1303, 0.0
        %v1336 = vmax.f32 %v1304, 0.0
        %v1337 = vmax.f32 %v1305, 0.0
        %v1338 = vmax.f32 %v1306, 0.0
        %v1339 = vmax.f32 %v1307, 0.0
        %v1340 = vmin.f32 %v1308, 1.0
        %v1341 = vmin.f32 %v1309, 1.0
        %v1342 = vmin.f32 %v1310, 1.0
        %v1343 = vmin.f32 %v1311, 1.0
        %v1344 = vmin.f32 %v1312, 1.0
        %v1345 = vmin.f32 %v1313, 1.0
        %v1346 = vmin.f32 %v1314, 1.0
        %v1347 = vmin.f32 %v1315, 1.0
        %v1348 = vmin.f32 %v1316, 1.0
        %v1349 = vmin.f32 %v1317, 1.0
        %v1350 = vmin.f32 %v1318, 1.0
        %v1351 = vmin.f32 %v1319, 1.0
        %v1352 = vmin.f32 %v1320, 1.0
        %v1353 = vmin.f32 %v1321, 1.0
        %v1354 = vmin.f32 %v1322, 1.0
        %v1355 = vmin.f32 %v1323, 1.0
        %v1356 = vmin.f32 %v1324, 1.0
        %v1357 = vmin.f32 %v1325, 1.0
        %v1358 = vmin.f32 %v1326, 1.0
        %v1359 = vmin.f32 %v1327, 1.0
        %v1360 = vmin.f32 %v1328, 1.0
        %v1361 = vmin.f32 %v1329, 1.0
        %v1362 = vmin.f32 %v1330, 1.0
        %v1363 = vmin.f32 %v1331, 1.0
        %v1364 = vmin.f32 %v1332, 1.0
        %v1365 = vmin.f32 %v1333, 1.0
        %v1366 = vmin.f32 %v1334, 1.0
        %v1367 = vmin.f32 %v1335, 1.0
        %v1368 = vmin.f32 %v1336, 1.0
        %v1369 = vmin.f32 %v1337, 1.0
        %v1370 = vmin.f32 %v1338, 1.0
        %v1371 = vmin.f32 %v1339, 1.0
        %v1372 = vrsqrt.pop %v1340
        %v1373 = vmul.f32 %v1340, %v1372
        %vm1374 = vcmp.eq.f32.partialorder %v1340, inf
        %v1375 = vsel %vm1374, %v1340, %v1373
        %vm1376 = vcmp.eq.f32.partialorder %v1340, 0.0
        %v1377 = vand.u32 %v1340, 2147483648
        %v1378 = vsel %vm1376, %v1377, %v1375
        %v1379 = vrsqrt.pop %v1341
        %v1380 = vmul.f32 %v1341, %v1379
        %vm1381 = vcmp.eq.f32.partialorder %v1341, inf
        %v1382 = vsel %vm1381, %v1341, %v1380
        %vm1383 = vcmp.eq.f32.partialorder %v1341, 0.0
        %v1384 = vand.u32 %v1341, 2147483648
        %v1385 = vsel %vm1383, %v1384, %v1382
        %v1386 = vrsqrt.pop %v1342
        %v1387 = vmul.f32 %v1342, %v1386
        %vm1388 = vcmp.eq.f32.partialorder %v1342, inf
        %v1389 = vsel %vm1388, %v1342, %v1387
        %vm1390 = vcmp.eq.f32.partialorder %v1342, 0.0
        %v1391 = vand.u32 %v1342, 2147483648
        %v1392 = vsel %vm1390, %v1391, %v1389
        %v1393 = vrsqrt.pop %v1343
        %v1394 = vmul.f32 %v1343, %v1393
        %vm1395 = vcmp.eq.f32.partialorder %v1343, inf
        %v1396 = vsel %vm1395, %v1343, %v1394
        %vm1397 = vcmp.eq.f32.partialorder %v1343, 0.0
        %v1398 = vand.u32 %v1343, 2147483648
        %v1399 = vsel %vm1397, %v1398, %v1396
        %v1400 = vrsqrt.pop %v1344
        %v1401 = vmul.f32 %v1344, %v1400
        %vm1402 = vcmp.eq.f32.partialorder %v1344, inf
        %v1403 = vsel %vm1402, %v1344, %v1401
        %vm1404 = vcmp.eq.f32.partialorder %v1344, 0.0
        %v1405 = vand.u32 %v1344, 2147483648
        %v1406 = vsel %vm1404, %v1405, %v1403
        %v1407 = vrsqrt.pop %v1345
        %v1408 = vmul.f32 %v1345, %v1407
        %vm1409 = vcmp.eq.f32.partialorder %v1345, inf
        %v1410 = vsel %vm1409, %v1345, %v1408
        %vm1411 = vcmp.eq.f32.partialorder %v1345, 0.0
        %v1412 = vand.u32 %v1345, 2147483648
        %v1413 = vsel %vm1411, %v1412, %v1410
        %v1414 = vrsqrt.pop %v1346
        %v1415 = vmul.f32 %v1346, %v1414
        %vm1416 = vcmp.eq.f32.partialorder %v1346, inf
        %v1417 = vsel %vm1416, %v1346, %v1415
        %vm1418 = vcmp.eq.f32.partialorder %v1346, 0.0
        %v1419 = vand.u32 %v1346, 2147483648
        %v1420 = vsel %vm1418, %v1419, %v1417
        %v1421 = vrsqrt.pop %v1347
        %v1422 = vmul.f32 %v1347, %v1421
        %vm1423 = vcmp.eq.f32.partialorder %v1347, inf
        %v1424 = vsel %vm1423, %v1347, %v1422
        %vm1425 = vcmp.eq.f32.partialorder %v1347, 0.0
        %v1426 = vand.u32 %v1347, 2147483648
        %v1427 = vsel %vm1425, %v1426, %v1424
        %v1428 = vrsqrt.pop %v1348
        %v1429 = vmul.f32 %v1348, %v1428
        %vm1430 = vcmp.eq.f32.partialorder %v1348, inf
        %v1431 = vsel %vm1430, %v1348, %v1429
        %vm1432 = vcmp.eq.f32.partialorder %v1348, 0.0
        %v1433 = vand.u32 %v1348, 2147483648
        %v1434 = vsel %vm1432, %v1433, %v1431
        %v1435 = vrsqrt.pop %v1349
        %v1436 = vmul.f32 %v1349, %v1435
        %vm1437 = vcmp.eq.f32.partialorder %v1349, inf
        %v1438 = vsel %vm1437, %v1349, %v1436
        %vm1439 = vcmp.eq.f32.partialorder %v1349, 0.0
        %v1440 = vand.u32 %v1349, 2147483648
        %v1441 = vsel %vm1439, %v1440, %v1438
        %v1442 = vrsqrt.pop %v1350
        %v1443 = vmul.f32 %v1350, %v1442
        %vm1444 = vcmp.eq.f32.partialorder %v1350, inf
        %v1445 = vsel %vm1444, %v1350, %v1443
        %vm1446 = vcmp.eq.f32.partialorder %v1350, 0.0
        %v1447 = vand.u32 %v1350, 2147483648
        %v1448 = vsel %vm1446, %v1447, %v1445
        %v1449 = vrsqrt.pop %v1351
        %v1450 = vmul.f32 %v1351, %v1449
        %vm1451 = vcmp.eq.f32.partialorder %v1351, inf
        %v1452 = vsel %vm1451, %v1351, %v1450
        %vm1453 = vcmp.eq.f32.partialorder %v1351, 0.0
        %v1454 = vand.u32 %v1351, 2147483648
        %v1455 = vsel %vm1453, %v1454, %v1452
        %v1456 = vrsqrt.pop %v1352
        %v1457 = vmul.f32 %v1352, %v1456
        %vm1458 = vcmp.eq.f32.partialorder %v1352, inf
        %v1459 = vsel %vm1458, %v1352, %v1457
        %vm1460 = vcmp.eq.f32.partialorder %v1352, 0.0
        %v1461 = vand.u32 %v1352, 2147483648
        %v1462 = vsel %vm1460, %v1461, %v1459
        %v1463 = vrsqrt.pop %v1353
        %v1464 = vmul.f32 %v1353, %v1463
        %vm1465 = vcmp.eq.f32.partialorder %v1353, inf
        %v1466 = vsel %vm1465, %v1353, %v1464
        %vm1467 = vcmp.eq.f32.partialorder %v1353, 0.0
        %v1468 = vand.u32 %v1353, 2147483648
        %v1469 = vsel %vm1467, %v1468, %v1466
        %v1470 = vrsqrt.pop %v1354
        %v1471 = vmul.f32 %v1354, %v1470
        %vm1472 = vcmp.eq.f32.partialorder %v1354, inf
        %v1473 = vsel %vm1472, %v1354, %v1471
        %vm1474 = vcmp.eq.f32.partialorder %v1354, 0.0
        %v1475 = vand.u32 %v1354, 2147483648
        %v1476 = vsel %vm1474, %v1475, %v1473
        %v1477 = vrsqrt.pop %v1355
        %v1478 = vmul.f32 %v1355, %v1477
        %vm1479 = vcmp.eq.f32.partialorder %v1355, inf
        %v1480 = vsel %vm1479, %v1355, %v1478
        %vm1481 = vcmp.eq.f32.partialorder %v1355, 0.0
        %v1482 = vand.u32 %v1355, 2147483648
        %v1483 = vsel %vm1481, %v1482, %v1480
        %v1484 = vrsqrt.pop %v1356
        %v1485 = vmul.f32 %v1356, %v1484
        %vm1486 = vcmp.eq.f32.partialorder %v1356, inf
        %v1487 = vsel %vm1486, %v1356, %v1485
        %vm1488 = vcmp.eq.f32.partialorder %v1356, 0.0
        %v1489 = vand.u32 %v1356, 2147483648
        %v1490 = vsel %vm1488, %v1489, %v1487
        %v1491 = vrsqrt.pop %v1357
        %v1492 = vmul.f32 %v1357, %v1491
        %vm1493 = vcmp.eq.f32.partialorder %v1357, inf
        %v1494 = vsel %vm1493, %v1357, %v1492
        %vm1495 = vcmp.eq.f32.partialorder %v1357, 0.0
        %v1496 = vand.u32 %v1357, 2147483648
        %v1497 = vsel %vm1495, %v1496, %v1494
        %v1498 = vrsqrt.pop %v1358
        %v1499 = vmul.f32 %v1358, %v1498
        %vm1500 = vcmp.eq.f32.partialorder %v1358, inf
        %v1501 = vsel %vm1500, %v1358, %v1499
        %vm1502 = vcmp.eq.f32.partialorder %v1358, 0.0
        %v1503 = vand.u32 %v1358, 2147483648
        %v1504 = vsel %vm1502, %v1503, %v1501
        %v1505 = vrsqrt.pop %v1359
        %v1506 = vmul.f32 %v1359, %v1505
        %vm1507 = vcmp.eq.f32.partialorder %v1359, inf
        %v1508 = vsel %vm1507, %v1359, %v1506
        %vm1509 = vcmp.eq.f32.partialorder %v1359, 0.0
        %v1510 = vand.u32 %v1359, 2147483648
        %v1511 = vsel %vm1509, %v1510, %v1508
        %v1512 = vrsqrt.pop %v1360
        %v1513 = vmul.f32 %v1360, %v1512
        %vm1514 = vcmp.eq.f32.partialorder %v1360, inf
        %v1515 = vsel %vm1514, %v1360, %v1513
        %vm1516 = vcmp.eq.f32.partialorder %v1360, 0.0
        %v1517 = vand.u32 %v1360, 2147483648
        %v1518 = vsel %vm1516, %v1517, %v1515
        %v1519 = vrsqrt.pop %v1361
        %v1520 = vmul.f32 %v1361, %v1519
        %vm1521 = vcmp.eq.f32.partialorder %v1361, inf
        %v1522 = vsel %vm1521, %v1361, %v1520
        %vm1523 = vcmp.eq.f32.partialorder %v1361, 0.0
        %v1524 = vand.u32 %v1361, 2147483648
        %v1525 = vsel %vm1523, %v1524, %v1522
        %v1526 = vrsqrt.pop %v1362
        %v1527 = vmul.f32 %v1362, %v1526
        %vm1528 = vcmp.eq.f32.partialorder %v1362, inf
        %v1529 = vsel %vm1528, %v1362, %v1527
        %vm1530 = vcmp.eq.f32.partialorder %v1362, 0.0
        %v1531 = vand.u32 %v1362, 2147483648
        %v1532 = vsel %vm1530, %v1531, %v1529
        %v1533 = vrsqrt.pop %v1363
        %v1534 = vmul.f32 %v1363, %v1533
        %vm1535 = vcmp.eq.f32.partialorder %v1363, inf
        %v1536 = vsel %vm1535, %v1363, %v1534
        %vm1537 = vcmp.eq.f32.partialorder %v1363, 0.0
        %v1538 = vand.u32 %v1363, 2147483648
        %v1539 = vsel %vm1537, %v1538, %v1536
        %v1540 = vrsqrt.pop %v1364
        %v1541 = vmul.f32 %v1364, %v1540
        %vm1542 = vcmp.eq.f32.partialorder %v1364, inf
        %v1543 = vsel %vm1542, %v1364, %v1541
        %vm1544 = vcmp.eq.f32.partialorder %v1364, 0.0
        %v1545 = vand.u32 %v1364, 2147483648
        %v1546 = vsel %vm1544, %v1545, %v1543
        %v1547 = vrsqrt.pop %v1365
        %v1548 = vmul.f32 %v1365, %v1547
        %vm1549 = vcmp.eq.f32.partialorder %v1365, inf
        %v1550 = vsel %vm1549, %v1365, %v1548
        %vm1551 = vcmp.eq.f32.partialorder %v1365, 0.0
        %v1552 = vand.u32 %v1365, 2147483648
        %v1553 = vsel %vm1551, %v1552, %v1550
        %v1554 = vrsqrt.pop %v1366
        %v1555 = vmul.f32 %v1366, %v1554
        %vm1556 = vcmp.eq.f32.partialorder %v1366, inf
        %v1557 = vsel %vm1556, %v1366, %v1555
        %vm1558 = vcmp.eq.f32.partialorder %v1366, 0.0
        %v1559 = vand.u32 %v1366, 2147483648
        %v1560 = vsel %vm1558, %v1559, %v1557
        %v1561 = vrsqrt.pop %v1367
        %v1562 = vmul.f32 %v1367, %v1561
        %vm1563 = vcmp.eq.f32.partialorder %v1367, inf
        %v1564 = vsel %vm1563, %v1367, %v1562
        %vm1565 = vcmp.eq.f32.partialorder %v1367, 0.0
        %v1566 = vand.u32 %v1367, 2147483648
        %v1567 = vsel %vm1565, %v1566, %v1564
        %v1568 = vrsqrt.pop %v1368
        %v1569 = vmul.f32 %v1368, %v1568
        %vm1570 = vcmp.eq.f32.partialorder %v1368, inf
        %v1571 = vsel %vm1570, %v1368, %v1569
        %vm1572 = vcmp.eq.f32.partialorder %v1368, 0.0
        %v1573 = vand.u32 %v1368, 2147483648
        %v1574 = vsel %vm1572, %v1573, %v1571
        %v1575 = vrsqrt.pop %v1369
        %v1576 = vmul.f32 %v1369, %v1575
        %vm1577 = vcmp.eq.f32.partialorder %v1369, inf
        %v1578 = vsel %vm1577, %v1369, %v1576
        %vm1579 = vcmp.eq.f32.partialorder %v1369, 0.0
        %v1580 = vand.u32 %v1369, 2147483648
        %v1581 = vsel %vm1579, %v1580, %v1578
        %v1582 = vrsqrt.pop %v1370
        %v1583 = vmul.f32 %v1370, %v1582
        %vm1584 = vcmp.eq.f32.partialorder %v1370, inf
        %v1585 = vsel %vm1584, %v1370, %v1583
        %vm1586 = vcmp.eq.f32.partialorder %v1370, 0.0
        %v1587 = vand.u32 %v1370, 2147483648
        %v1588 = vsel %vm1586, %v1587, %v1585
        %v1589 = vrsqrt.pop %v1371
        %v1590 = vmul.f32 %v1371, %v1589
        %vm1591 = vcmp.eq.f32.partialorder %v1371, inf
        %v1592 = vsel %vm1591, %v1371, %v1590
        %vm1593 = vcmp.eq.f32.partialorder %v1371, 0.0
        %v1594 = vand.u32 %v1371, 2147483648
        %v1595 = vsel %vm1593, %v1594, %v1592
        %vm1596 = vcmp.lt.f32.partialorder %v1340, 0.25
        %vm1597 = vcmp.lt.f32.partialorder %v1341, 0.25
        %vm1598 = vcmp.lt.f32.partialorder %v1342, 0.25
        %vm1599 = vcmp.lt.f32.partialorder %v1343, 0.25
        %vm1600 = vcmp.lt.f32.partialorder %v1344, 0.25
        %vm1601 = vcmp.lt.f32.partialorder %v1345, 0.25
        %vm1602 = vcmp.lt.f32.partialorder %v1346, 0.25
        %vm1603 = vcmp.lt.f32.partialorder %v1347, 0.25
        %vm1604 = vcmp.lt.f32.partialorder %v1348, 0.25
        %vm1605 = vcmp.lt.f32.partialorder %v1349, 0.25
        %vm1606 = vcmp.lt.f32.partialorder %v1350, 0.25
        %vm1607 = vcmp.lt.f32.partialorder %v1351, 0.25
        %vm1608 = vcmp.lt.f32.partialorder %v1352, 0.25
        %vm1609 = vcmp.lt.f32.partialorder %v1353, 0.25
        %vm1610 = vcmp.lt.f32.partialorder %v1354, 0.25
        %vm1611 = vcmp.lt.f32.partialorder %v1355, 0.25
        %vm1612 = vcmp.lt.f32.partialorder %v1356, 0.25
        %vm1613 = vcmp.lt.f32.partialorder %v1357, 0.25
        %vm1614 = vcmp.lt.f32.partialorder %v1358, 0.25
        %vm1615 = vcmp.lt.f32.partialorder %v1359, 0.25
        %vm1616 = vcmp.lt.f32.partialorder %v1360, 0.25
        %vm1617 = vcmp.lt.f32.partialorder %v1361, 0.25
        %vm1618 = vcmp.lt.f32.partialorder %v1362, 0.25
        %vm1619 = vcmp.lt.f32.partialorder %v1363, 0.25
        %vm1620 = vcmp.lt.f32.partialorder %v1364, 0.25
        %vm1621 = vcmp.lt.f32.partialorder %v1365, 0.25
        %vm1622 = vcmp.lt.f32.partialorder %v1366, 0.25
        %vm1623 = vcmp.lt.f32.partialorder %v1367, 0.25
        %vm1624 = vcmp.lt.f32.partialorder %v1368, 0.25
        %vm1625 = vcmp.lt.f32.partialorder %v1369, 0.25
        %vm1626 = vcmp.lt.f32.partialorder %v1370, 0.25
        %vm1627 = vcmp.lt.f32.partialorder %v1371, 0.25
        %v1628 = vsub.f32 1.0, %v1378
        %v1629 = vsub.f32 1.0, %v1385
        %v1630 = vsub.f32 1.0, %v1392
        %v1631 = vsub.f32 1.0, %v1399
        %v1632 = vsub.f32 1.0, %v1406
        %v1633 = vsub.f32 1.0, %v1413
        %v1634 = vsub.f32 1.0, %v1420
        %v1635 = vsub.f32 1.0, %v1427
        %v1636 = vsub.f32 1.0, %v1434
        %v1637 = vsub.f32 1.0, %v1441
        %v1638 = vsub.f32 1.0, %v1448
        %v1639 = vsub.f32 1.0, %v1455
        %v1640 = vsub.f32 1.0, %v1462
        %v1641 = vsub.f32 1.0, %v1469
        %v1642 = vsub.f32 1.0, %v1476
        %v1643 = vsub.f32 1.0, %v1483
        %v1644 = vsub.f32 1.0, %v1490
        %v1645 = vsub.f32 1.0, %v1497
        %v1646 = vsub.f32 1.0, %v1504
        %v1647 = vsub.f32 1.0, %v1511
        %v1648 = vsub.f32 1.0, %v1518
        %v1649 = vsub.f32 1.0, %v1525
        %v1650 = vsub.f32 1.0, %v1532
        %v1651 = vsub.f32 1.0, %v1539
        %v1652 = vsub.f32 1.0, %v1546
        %v1653 = vsub.f32 1.0, %v1553
        %v1654 = vsub.f32 1.0, %v1560
        %v1655 = vsub.f32 1.0, %v1567
        %v1656 = vsub.f32 1.0, %v1574
        %v1657 = vsub.f32 1.0, %v1581
        %v1658 = vsub.f32 1.0, %v1588
        %v1659 = vsub.f32 1.0, %v1595
        %v1660 = vmul.f32 %v1628, 0.5
        %v1661 = vmul.f32 %v1629, 0.5
        %v1662 = vmul.f32 %v1630, 0.5
        %v1663 = vmul.f32 %v1631, 0.5
        %v1664 = vmul.f32 %v1632, 0.5
        %v1665 = vmul.f32 %v1633, 0.5
        %v1666 = vmul.f32 %v1634, 0.5
        %v1667 = vmul.f32 %v1635, 0.5
        %v1668 = vmul.f32 %v1636, 0.5
        %v1669 = vmul.f32 %v1637, 0.5
        %v1670 = vmul.f32 %v1638, 0.5
        %v1671 = vmul.f32 %v1639, 0.5
        %v1672 = vmul.f32 %v1640, 0.5
        %v1673 = vmul.f32 %v1641, 0.5
        %v1674 = vmul.f32 %v1642, 0.5
        %v1675 = vmul.f32 %v1643, 0.5
        %v1676 = vmul.f32 %v1644, 0.5
        %v1677 = vmul.f32 %v1645, 0.5
        %v1678 = vmul.f32 %v1646, 0.5
        %v1679 = vmul.f32 %v1647, 0.5
        %v1680 = vmul.f32 %v1648, 0.5
        %v1681 = vmul.f32 %v1649, 0.5
        %v1682 = vmul.f32 %v1650, 0.5
        %v1683 = vmul.f32 %v1651, 0.5
        %v1684 = vmul.f32 %v1652, 0.5
        %v1685 = vmul.f32 %v1653, 0.5
        %v1686 = vmul.f32 %v1654, 0.5
        %v1687 = vmul.f32 %v1655, 0.5
        %v1688 = vmul.f32 %v1656, 0.5
        %v1689 = vmul.f32 %v1657, 0.5
        %v1690 = vmul.f32 %v1658, 0.5
        %v1691 = vmul.f32 %v1659, 0.5
        %v1692 = vsel %vm1596, %v1340, %v1660
        %v1693 = vsel %vm1597, %v1341, %v1661
        %v1694 = vsel %vm1598, %v1342, %v1662
        %v1695 = vsel %vm1599, %v1343, %v1663
        %v1696 = vsel %vm1600, %v1344, %v1664
        %v1697 = vsel %vm1601, %v1345, %v1665
        %v1698 = vsel %vm1602, %v1346, %v1666
        %v1699 = vsel %vm1603, %v1347, %v1667
        %v1700 = vsel %vm1604, %v1348, %v1668
        %v1701 = vsel %vm1605, %v1349, %v1669
        %v1702 = vsel %vm1606, %v1350, %v1670
        %v1703 = vsel %vm1607, %v1351, %v1671
        %v1704 = vsel %vm1608, %v1352, %v1672
        %v1705 = vsel %vm1609, %v1353, %v1673
        %v1706 = vsel %vm1610, %v1354, %v1674
        %v1707 = vsel %vm1611, %v1355, %v1675
        %v1708 = vsel %vm1612, %v1356, %v1676
        %v1709 = vsel %vm1613, %v1357, %v1677
        %v1710 = vsel %vm1614, %v1358, %v1678
        %v1711 = vsel %vm1615, %v1359, %v1679
        %v1712 = vsel %vm1616, %v1360, %v1680
        %v1713 = vsel %vm1617, %v1361, %v1681
        %v1714 = vsel %vm1618, %v1362, %v1682
        %v1715 = vsel %vm1619, %v1363, %v1683
        %v1716 = vsel %vm1620, %v1364, %v1684
        %v1717 = vsel %vm1621, %v1365, %v1685
        %v1718 = vsel %vm1622, %v1366, %v1686
        %v1719 = vsel %vm1623, %v1367, %v1687
        %v1720 = vsel %vm1624, %v1368, %v1688
        %v1721 = vsel %vm1625, %v1369, %v1689
        %v1722 = vsel %vm1626, %v1370, %v1690
        %v1723 = vsel %vm1627, %v1371, %v1691
        %v1724 = vrsqrt.pop %v1692
        %v1725 = vmul.f32 %v1692, %v1724
        %vm1726 = vcmp.eq.f32.partialorder %v1692, inf
        %v1727 = vsel %vm1726, %v1692, %v1725
        %vm1728 = vcmp.eq.f32.partialorder %v1692, 0.0
        %v1729 = vand.u32 %v1692, 2147483648
        %v1730 = vsel %vm1728, %v1729, %v1727
        %v1731 = vrsqrt.pop %v1693
        %v1732 = vmul.f32 %v1693, %v1731
        %vm1733 = vcmp.eq.f32.partialorder %v1693, inf
        %v1734 = vsel %vm1733, %v1693, %v1732
        %vm1735 = vcmp.eq.f32.partialorder %v1693, 0.0
        %v1736 = vand.u32 %v1693, 2147483648
        %v1737 = vsel %vm1735, %v1736, %v1734
        %v1738 = vrsqrt.pop %v1694
        %v1739 = vmul.f32 %v1694, %v1738
        %vm1740 = vcmp.eq.f32.partialorder %v1694, inf
        %v1741 = vsel %vm1740, %v1694, %v1739
        %vm1742 = vcmp.eq.f32.partialorder %v1694, 0.0
        %v1743 = vand.u32 %v1694, 2147483648
        %v1744 = vsel %vm1742, %v1743, %v1741
        %v1745 = vrsqrt.pop %v1695
        %v1746 = vmul.f32 %v1695, %v1745
        %vm1747 = vcmp.eq.f32.partialorder %v1695, inf
        %v1748 = vsel %vm1747, %v1695, %v1746
        %vm1749 = vcmp.eq.f32.partialorder %v1695, 0.0
        %v1750 = vand.u32 %v1695, 2147483648
        %v1751 = vsel %vm1749, %v1750, %v1748
        %v1752 = vrsqrt.pop %v1696
        %v1753 = vmul.f32 %v1696, %v1752
        %vm1754 = vcmp.eq.f32.partialorder %v1696, inf
        %v1755 = vsel %vm1754, %v1696, %v1753
        %vm1756 = vcmp.eq.f32.partialorder %v1696, 0.0
        %v1757 = vand.u32 %v1696, 2147483648
        %v1758 = vsel %vm1756, %v1757, %v1755
        %v1759 = vrsqrt.pop %v1697
        %v1760 = vmul.f32 %v1697, %v1759
        %vm1761 = vcmp.eq.f32.partialorder %v1697, inf
        %v1762 = vsel %vm1761, %v1697, %v1760
        %vm1763 = vcmp.eq.f32.partialorder %v1697, 0.0
        %v1764 = vand.u32 %v1697, 2147483648
        %v1765 = vsel %vm1763, %v1764, %v1762
        %v1766 = vrsqrt.pop %v1698
        %v1767 = vmul.f32 %v1698, %v1766
        %vm1768 = vcmp.eq.f32.partialorder %v1698, inf
        %v1769 = vsel %vm1768, %v1698, %v1767
        %vm1770 = vcmp.eq.f32.partialorder %v1698, 0.0
        %v1771 = vand.u32 %v1698, 2147483648
        %v1772 = vsel %vm1770, %v1771, %v1769
        %v1773 = vrsqrt.pop %v1699
        %v1774 = vmul.f32 %v1699, %v1773
        %vm1775 = vcmp.eq.f32.partialorder %v1699, inf
        %v1776 = vsel %vm1775, %v1699, %v1774
        %vm1777 = vcmp.eq.f32.partialorder %v1699, 0.0
        %v1778 = vand.u32 %v1699, 2147483648
        %v1779 = vsel %vm1777, %v1778, %v1776
        %v1780 = vrsqrt.pop %v1700
        %v1781 = vmul.f32 %v1700, %v1780
        %vm1782 = vcmp.eq.f32.partialorder %v1700, inf
        %v1783 = vsel %vm1782, %v1700, %v1781
        %vm1784 = vcmp.eq.f32.partialorder %v1700, 0.0
        %v1785 = vand.u32 %v1700, 2147483648
        %v1786 = vsel %vm1784, %v1785, %v1783
        %v1787 = vrsqrt.pop %v1701
        %v1788 = vmul.f32 %v1701, %v1787
        %vm1789 = vcmp.eq.f32.partialorder %v1701, inf
        %v1790 = vsel %vm1789, %v1701, %v1788
        %vm1791 = vcmp.eq.f32.partialorder %v1701, 0.0
        %v1792 = vand.u32 %v1701, 2147483648
        %v1793 = vsel %vm1791, %v1792, %v1790
        %v1794 = vrsqrt.pop %v1702
        %v1795 = vmul.f32 %v1702, %v1794
        %vm1796 = vcmp.eq.f32.partialorder %v1702, inf
        %v1797 = vsel %vm1796, %v1702, %v1795
        %vm1798 = vcmp.eq.f32.partialorder %v1702, 0.0
        %v1799 = vand.u32 %v1702, 2147483648
        %v1800 = vsel %vm1798, %v1799, %v1797
        %v1801 = vrsqrt.pop %v1703
        %v1802 = vmul.f32 %v1703, %v1801
        %vm1803 = vcmp.eq.f32.partialorder %v1703, inf
        %v1804 = vsel %vm1803, %v1703, %v1802
        %vm1805 = vcmp.eq.f32.partialorder %v1703, 0.0
        %v1806 = vand.u32 %v1703, 2147483648
        %v1807 = vsel %vm1805, %v1806, %v1804
        %v1808 = vrsqrt.pop %v1704
        %v1809 = vmul.f32 %v1704, %v1808
        %vm1810 = vcmp.eq.f32.partialorder %v1704, inf
        %v1811 = vsel %vm1810, %v1704, %v1809
        %vm1812 = vcmp.eq.f32.partialorder %v1704, 0.0
        %v1813 = vand.u32 %v1704, 2147483648
        %v1814 = vsel %vm1812, %v1813, %v1811
        %v1815 = vrsqrt.pop %v1705
        %v1816 = vmul.f32 %v1705, %v1815
        %vm1817 = vcmp.eq.f32.partialorder %v1705, inf
        %v1818 = vsel %vm1817, %v1705, %v1816
        %vm1819 = vcmp.eq.f32.partialorder %v1705, 0.0
        %v1820 = vand.u32 %v1705, 2147483648
        %v1821 = vsel %vm1819, %v1820, %v1818
        %v1822 = vrsqrt.pop %v1706
        %v1823 = vmul.f32 %v1706, %v1822
        %vm1824 = vcmp.eq.f32.partialorder %v1706, inf
        %v1825 = vsel %vm1824, %v1706, %v1823
        %vm1826 = vcmp.eq.f32.partialorder %v1706, 0.0
        %v1827 = vand.u32 %v1706, 2147483648
        %v1828 = vsel %vm1826, %v1827, %v1825
        %v1829 = vrsqrt.pop %v1707
        %v1830 = vmul.f32 %v1707, %v1829
        %vm1831 = vcmp.eq.f32.partialorder %v1707, inf
        %v1832 = vsel %vm1831, %v1707, %v1830
        %vm1833 = vcmp.eq.f32.partialorder %v1707, 0.0
        %v1834 = vand.u32 %v1707, 2147483648
        %v1835 = vsel %vm1833, %v1834, %v1832
        %v1836 = vrsqrt.pop %v1708
        %v1837 = vmul.f32 %v1708, %v1836
        %vm1838 = vcmp.eq.f32.partialorder %v1708, inf
        %v1839 = vsel %vm1838, %v1708, %v1837
        %vm1840 = vcmp.eq.f32.partialorder %v1708, 0.0
        %v1841 = vand.u32 %v1708, 2147483648
        %v1842 = vsel %vm1840, %v1841, %v1839
        %v1843 = vrsqrt.pop %v1709
        %v1844 = vmul.f32 %v1709, %v1843
        %vm1845 = vcmp.eq.f32.partialorder %v1709, inf
        %v1846 = vsel %vm1845, %v1709, %v1844
        %vm1847 = vcmp.eq.f32.partialorder %v1709, 0.0
        %v1848 = vand.u32 %v1709, 2147483648
        %v1849 = vsel %vm1847, %v1848, %v1846
        %v1850 = vrsqrt.pop %v1710
        %v1851 = vmul.f32 %v1710, %v1850
        %vm1852 = vcmp.eq.f32.partialorder %v1710, inf
        %v1853 = vsel %vm1852, %v1710, %v1851
        %vm1854 = vcmp.eq.f32.partialorder %v1710, 0.0
        %v1855 = vand.u32 %v1710, 2147483648
        %v1856 = vsel %vm1854, %v1855, %v1853
        %v1857 = vrsqrt.pop %v1711
        %v1858 = vmul.f32 %v1711, %v1857
        %vm1859 = vcmp.eq.f32.partialorder %v1711, inf
        %v1860 = vsel %vm1859, %v1711, %v1858
        %vm1861 = vcmp.eq.f32.partialorder %v1711, 0.0
        %v1862 = vand.u32 %v1711, 2147483648
        %v1863 = vsel %vm1861, %v1862, %v1860
        %v1864 = vrsqrt.pop %v1712
        %v1865 = vmul.f32 %v1712, %v1864
        %vm1866 = vcmp.eq.f32.partialorder %v1712, inf
        %v1867 = vsel %vm1866, %v1712, %v1865
        %vm1868 = vcmp.eq.f32.partialorder %v1712, 0.0
        %v1869 = vand.u32 %v1712, 2147483648
        %v1870 = vsel %vm1868, %v1869, %v1867
        %v1871 = vrsqrt.pop %v1713
        %v1872 = vmul.f32 %v1713, %v1871
        %vm1873 = vcmp.eq.f32.partialorder %v1713, inf
        %v1874 = vsel %vm1873, %v1713, %v1872
        %vm1875 = vcmp.eq.f32.partialorder %v1713, 0.0
        %v1876 = vand.u32 %v1713, 2147483648
        %v1877 = vsel %vm1875, %v1876, %v1874
        %v1878 = vrsqrt.pop %v1714
        %v1879 = vmul.f32 %v1714, %v1878
        %vm1880 = vcmp.eq.f32.partialorder %v1714, inf
        %v1881 = vsel %vm1880, %v1714, %v1879
        %vm1882 = vcmp.eq.f32.partialorder %v1714, 0.0
        %v1883 = vand.u32 %v1714, 2147483648
        %v1884 = vsel %vm1882, %v1883, %v1881
        %v1885 = vrsqrt.pop %v1715
        %v1886 = vmul.f32 %v1715, %v1885
        %vm1887 = vcmp.eq.f32.partialorder %v1715, inf
        %v1888 = vsel %vm1887, %v1715, %v1886
        %vm1889 = vcmp.eq.f32.partialorder %v1715, 0.0
        %v1890 = vand.u32 %v1715, 2147483648
        %v1891 = vsel %vm1889, %v1890, %v1888
        %v1892 = vrsqrt.pop %v1716
        %v1893 = vmul.f32 %v1716, %v1892
        %vm1894 = vcmp.eq.f32.partialorder %v1716, inf
        %v1895 = vsel %vm1894, %v1716, %v1893
        %vm1896 = vcmp.eq.f32.partialorder %v1716, 0.0
        %v1897 = vand.u32 %v1716, 2147483648
        %v1898 = vsel %vm1896, %v1897, %v1895
        %v1899 = vrsqrt.pop %v1717
        %v1900 = vmul.f32 %v1717, %v1899
        %vm1901 = vcmp.eq.f32.partialorder %v1717, inf
        %v1902 = vsel %vm1901, %v1717, %v1900
        %vm1903 = vcmp.eq.f32.partialorder %v1717, 0.0
        %v1904 = vand.u32 %v1717, 2147483648
        %v1905 = vsel %vm1903, %v1904, %v1902
        %v1906 = vrsqrt.pop %v1718
        %v1907 = vmul.f32 %v1718, %v1906
        %vm1908 = vcmp.eq.f32.partialorder %v1718, inf
        %v1909 = vsel %vm1908, %v1718, %v1907
        %vm1910 = vcmp.eq.f32.partialorder %v1718, 0.0
        %v1911 = vand.u32 %v1718, 2147483648
        %v1912 = vsel %vm1910, %v1911, %v1909
        %v1913 = vrsqrt.pop %v1719
        %v1914 = vmul.f32 %v1719, %v1913
        %vm1915 = vcmp.eq.f32.partialorder %v1719, inf
        %v1916 = vsel %vm1915, %v1719, %v1914
        %vm1917 = vcmp.eq.f32.partialorder %v1719, 0.0
        %v1918 = vand.u32 %v1719, 2147483648
        %v1919 = vsel %vm1917, %v1918, %v1916
        %v1920 = vrsqrt.pop %v1720
        %v1921 = vmul.f32 %v1720, %v1920
        %vm1922 = vcmp.eq.f32.partialorder %v1720, inf
        %v1923 = vsel %vm1922, %v1720, %v1921
        %vm1924 = vcmp.eq.f32.partialorder %v1720, 0.0
        %v1925 = vand.u32 %v1720, 2147483648
        %v1926 = vsel %vm1924, %v1925, %v1923
        %v1927 = vrsqrt.pop %v1721
        %v1928 = vmul.f32 %v1721, %v1927
        %vm1929 = vcmp.eq.f32.partialorder %v1721, inf
        %v1930 = vsel %vm1929, %v1721, %v1928
        %vm1931 = vcmp.eq.f32.partialorder %v1721, 0.0
        %v1932 = vand.u32 %v1721, 2147483648
        %v1933 = vsel %vm1931, %v1932, %v1930
        %v1934 = vrsqrt.pop %v1722
        %v1935 = vmul.f32 %v1722, %v1934
        %vm1936 = vcmp.eq.f32.partialorder %v1722, inf
        %v1937 = vsel %vm1936, %v1722, %v1935
        %vm1938 = vcmp.eq.f32.partialorder %v1722, 0.0
        %v1939 = vand.u32 %v1722, 2147483648
        %v1940 = vsel %vm1938, %v1939, %v1937
        %v1941 = vrsqrt.pop %v1723
        %v1942 = vmul.f32 %v1723, %v1941
        %vm1943 = vcmp.eq.f32.partialorder %v1723, inf
        %v1944 = vsel %vm1943, %v1723, %v1942
        %vm1945 = vcmp.eq.f32.partialorder %v1723, 0.0
        %v1946 = vand.u32 %v1723, 2147483648
        %v1947 = vsel %vm1945, %v1946, %v1944
        %v1948 = vmul.f32 %v1692, -0.008656363
        %v1949 = vmul.f32 %v1693, -0.008656363
        %v1950 = vmul.f32 %v1694, -0.008656363
        %v1951 = vmul.f32 %v1695, -0.008656363
        %v1952 = vmul.f32 %v1696, -0.008656363
        %v1953 = vmul.f32 %v1697, -0.008656363
        %v1954 = vmul.f32 %v1698, -0.008656363
        %v1955 = vmul.f32 %v1699, -0.008656363
        %v1956 = vmul.f32 %v1700, -0.008656363
        %v1957 = vmul.f32 %v1701, -0.008656363
        %v1958 = vmul.f32 %v1702, -0.008656363
        %v1959 = vmul.f32 %v1703, -0.008656363
        %v1960 = vmul.f32 %v1704, -0.008656363
        %v1961 = vmul.f32 %v1705, -0.008656363
        %v1962 = vmul.f32 %v1706, -0.008656363
        %v1963 = vmul.f32 %v1707, -0.008656363
        %v1964 = vmul.f32 %v1708, -0.008656363
        %v1965 = vmul.f32 %v1709, -0.008656363
        %v1966 = vmul.f32 %v1710, -0.008656363
        %v1967 = vmul.f32 %v1711, -0.008656363
        %v1968 = vmul.f32 %v1712, -0.008656363
        %v1969 = vmul.f32 %v1713, -0.008656363
        %v1970 = vmul.f32 %v1714, -0.008656363
        %v1971 = vmul.f32 %v1715, -0.008656363
        %v1972 = vmul.f32 %v1716, -0.008656363
        %v1973 = vmul.f32 %v1717, -0.008656363
        %v1974 = vmul.f32 %v1718, -0.008656363
        %v1975 = vmul.f32 %v1719, -0.008656363
        %v1976 = vmul.f32 %v1720, -0.008656363
        %v1977 = vmul.f32 %v1721, -0.008656363
        %v1978 = vmul.f32 %v1722, -0.008656363
        %v1979 = vmul.f32 %v1723, -0.008656363
        %v1980 = vadd.f32 %v1948, -0.042743422
        %v1981 = vadd.f32 %v1949, -0.042743422
        %v1982 = vadd.f32 %v1950, -0.042743422
        %v1983 = vadd.f32 %v1951, -0.042743422
        %v1984 = vadd.f32 %v1952, -0.042743422
        %v1985 = vadd.f32 %v1953, -0.042743422
        %v1986 = vadd.f32 %v1954, -0.042743422
        %v1987 = vadd.f32 %v1955, -0.042743422
        %v1988 = vadd.f32 %v1956, -0.042743422
        %v1989 = vadd.f32 %v1957, -0.042743422
        %v1990 = vadd.f32 %v1958, -0.042743422
        %v1991 = vadd.f32 %v1959, -0.042743422
        %v1992 = vadd.f32 %v1960, -0.042743422
        %v1993 = vadd.f32 %v1961, -0.042743422
        %v1994 = vadd.f32 %v1962, -0.042743422
        %v1995 = vadd.f32 %v1963, -0.042743422
        %v1996 = vadd.f32 %v1964, -0.042743422
        %v1997 = vadd.f32 %v1965, -0.042743422
        %v1998 = vadd.f32 %v1966, -0.042743422
        %v1999 = vadd.f32 %v1967, -0.042743422
        %v2000 = vadd.f32 %v1968, -0.042743422
        %v2001 = vadd.f32 %v1969, -0.042743422
        %v2002 = vadd.f32 %v1970, -0.042743422
        %v2003 = vadd.f32 %v1971, -0.042743422
        %v2004 = vadd.f32 %v1972, -0.042743422
        %v2005 = vadd.f32 %v1973, -0.042743422
        %v2006 = vadd.f32 %v1974, -0.042743422
        %v2007 = vadd.f32 %v1975, -0.042743422
        %v2008 = vadd.f32 %v1976, -0.042743422
        %v2009 = vadd.f32 %v1977, -0.042743422
        %v2010 = vadd.f32 %v1978, -0.042743422
        %v2011 = vadd.f32 %v1979, -0.042743422
        %v2012 = vmul.f32 %v1692, %v1980
        %v2013 = vmul.f32 %v1693, %v1981
        %v2014 = vmul.f32 %v1694, %v1982
        %v2015 = vmul.f32 %v1695, %v1983
        %v2016 = vmul.f32 %v1696, %v1984
        %v2017 = vmul.f32 %v1697, %v1985
        %v2018 = vmul.f32 %v1698, %v1986
        %v2019 = vmul.f32 %v1699, %v1987
        %v2020 = vmul.f32 %v1700, %v1988
        %v2021 = vmul.f32 %v1701, %v1989
        %v2022 = vmul.f32 %v1702, %v1990
        %v2023 = vmul.f32 %v1703, %v1991
        %v2024 = vmul.f32 %v1704, %v1992
        %v2025 = vmul.f32 %v1705, %v1993
        %v2026 = vmul.f32 %v1706, %v1994
        %v2027 = vmul.f32 %v1707, %v1995
        %v2028 = vmul.f32 %v1708, %v1996
        %v2029 = vmul.f32 %v1709, %v1997
        %v2030 = vmul.f32 %v1710, %v1998
        %v2031 = vmul.f32 %v1711, %v1999
        %v2032 = vmul.f32 %v1712, %v2000
        %v2033 = vmul.f32 %v1713, %v2001
        %v2034 = vmul.f32 %v1714, %v2002
        %v2035 = vmul.f32 %v1715, %v2003
        %v2036 = vmul.f32 %v1716, %v2004
        %v2037 = vmul.f32 %v1717, %v2005
        %v2038 = vmul.f32 %v1718, %v2006
        %v2039 = vmul.f32 %v1719, %v2007
        %v2040 = vmul.f32 %v1720, %v2008
        %v2041 = vmul.f32 %v1721, %v2009
        %v2042 = vmul.f32 %v1722, %v2010
        %v2043 = vmul.f32 %v1723, %v2011
        %v2044 = vadd.f32 %v2012, 0.16666587
        %v2045 = vadd.f32 %v2013, 0.16666587
        %v2046 = vadd.f32 %v2014, 0.16666587
        %v2047 = vadd.f32 %v2015, 0.16666587
        %v2048 = vadd.f32 %v2016, 0.16666587
        %v2049 = vadd.f32 %v2017, 0.16666587
        %v2050 = vadd.f32 %v2018, 0.16666587
        %v2051 = vadd.f32 %v2019, 0.16666587
        %v2052 = vadd.f32 %v2020, 0.16666587
        %v2053 = vadd.f32 %v2021, 0.16666587
        %v2054 = vadd.f32 %v2022, 0.16666587
        %v2055 = vadd.f32 %v2023, 0.16666587
        %v2056 = vadd.f32 %v2024, 0.16666587
        %v2057 = vadd.f32 %v2025, 0.16666587
        %v2058 = vadd.f32 %v2026, 0.16666587
        %v2059 = vadd.f32 %v2027, 0.16666587
        %v2060 = vadd.f32 %v2028, 0.16666587
        %v2061 = vadd.f32 %v2029, 0.16666587
        %v2062 = vadd.f32 %v2030, 0.16666587
        %v2063 = vadd.f32 %v2031, 0.16666587
        %v2064 = vadd.f32 %v2032, 0.16666587
        %v2065 = vadd.f32 %v2033, 0.16666587
        %v2066 = vadd.f32 %v2034, 0.16666587
        %v2067 = vadd.f32 %v2035, 0.16666587
        %v2068 = vadd.f32 %v2036, 0.16666587
        %v2069 = vadd.f32 %v2037, 0.16666587
        %v2070 = vadd.f32 %v2038, 0.16666587
        %v2071 = vadd.f32 %v2039, 0.16666587
        %v2072 = vadd.f32 %v2040, 0.16666587
        %v2073 = vadd.f32 %v2041, 0.16666587
        %v2074 = vadd.f32 %v2042, 0.16666587
        %v2075 = vadd.f32 %v2043, 0.16666587
        %v2076 = vmul.f32 %v1692, %v2044
        %v2077 = vmul.f32 %v1693, %v2045
        %v2078 = vmul.f32 %v1694, %v2046
        %v2079 = vmul.f32 %v1695, %v2047
        %v2080 = vmul.f32 %v1696, %v2048
        %v2081 = vmul.f32 %v1697, %v2049
        %v2082 = vmul.f32 %v1698, %v2050
        %v2083 = vmul.f32 %v1699, %v2051
        %v2084 = vmul.f32 %v1700, %v2052
        %v2085 = vmul.f32 %v1701, %v2053
        %v2086 = vmul.f32 %v1702, %v2054
        %v2087 = vmul.f32 %v1703, %v2055
        %v2088 = vmul.f32 %v1704, %v2056
        %v2089 = vmul.f32 %v1705, %v2057
        %v2090 = vmul.f32 %v1706, %v2058
        %v2091 = vmul.f32 %v1707, %v2059
        %v2092 = vmul.f32 %v1708, %v2060
        %v2093 = vmul.f32 %v1709, %v2061
        %v2094 = vmul.f32 %v1710, %v2062
        %v2095 = vmul.f32 %v1711, %v2063
        %v2096 = vmul.f32 %v1712, %v2064
        %v2097 = vmul.f32 %v1713, %v2065
        %v2098 = vmul.f32 %v1714, %v2066
        %v2099 = vmul.f32 %v1715, %v2067
        %v2100 = vmul.f32 %v1716, %v2068
        %v2101 = vmul.f32 %v1717, %v2069
        %v2102 = vmul.f32 %v1718, %v2070
        %v2103 = vmul.f32 %v1719, %v2071
        %v2104 = vmul.f32 %v1720, %v2072
        %v2105 = vmul.f32 %v1721, %v2073
        %v2106 = vmul.f32 %v1722, %v2074
        %v2107 = vmul.f32 %v1723, %v2075
        %v2108 = vmul.f32 %v1692, -0.70662963
        %v2109 = vmul.f32 %v1693, -0.70662963
        %v2110 = vmul.f32 %v1694, -0.70662963
        %v2111 = vmul.f32 %v1695, -0.70662963
        %v2112 = vmul.f32 %v1696, -0.70662963
        %v2113 = vmul.f32 %v1697, -0.70662963
        %v2114 = vmul.f32 %v1698, -0.70662963
        %v2115 = vmul.f32 %v1699, -0.70662963
        %v2116 = vmul.f32 %v1700, -0.70662963
        %v2117 = vmul.f32 %v1701, -0.70662963
        %v2118 = vmul.f32 %v1702, -0.70662963
        %v2119 = vmul.f32 %v1703, -0.70662963
        %v2120 = vmul.f32 %v1704, -0.70662963
        %v2121 = vmul.f32 %v1705, -0.70662963
        %v2122 = vmul.f32 %v1706, -0.70662963
        %v2123 = vmul.f32 %v1707, -0.70662963
        %v2124 = vmul.f32 %v1708, -0.70662963
        %v2125 = vmul.f32 %v1709, -0.70662963
        %v2126 = vmul.f32 %v1710, -0.70662963
        %v2127 = vmul.f32 %v1711, -0.70662963
        %v2128 = vmul.f32 %v1712, -0.70662963
        %v2129 = vmul.f32 %v1713, -0.70662963
        %v2130 = vmul.f32 %v1714, -0.70662963
        %v2131 = vmul.f32 %v1715, -0.70662963
        %v2132 = vmul.f32 %v1716, -0.70662963
        %v2133 = vmul.f32 %v1717, -0.70662963
        %v2134 = vmul.f32 %v1718, -0.70662963
        %v2135 = vmul.f32 %v1719, -0.70662963
        %v2136 = vmul.f32 %v1720, -0.70662963
        %v2137 = vmul.f32 %v1721, -0.70662963
        %v2138 = vmul.f32 %v1722, -0.70662963
        %v2139 = vmul.f32 %v1723, -0.70662963
        %v2140 = vadd.f32 %v2108, 1.0
        %v2141 = vadd.f32 %v2109, 1.0
        %v2142 = vadd.f32 %v2110, 1.0
        %v2143 = vadd.f32 %v2111, 1.0
        %v2144 = vadd.f32 %v2112, 1.0
        %v2145 = vadd.f32 %v2113, 1.0
        %v2146 = vadd.f32 %v2114, 1.0
        %v2147 = vadd.f32 %v2115, 1.0
        %v2148 = vadd.f32 %v2116, 1.0
        %v2149 = vadd.f32 %v2117, 1.0
        %v2150 = vadd.f32 %v2118, 1.0
        %v2151 = vadd.f32 %v2119, 1.0
        %v2152 = vadd.f32 %v2120, 1.0
        %v2153 = vadd.f32 %v2121, 1.0
        %v2154 = vadd.f32 %v2122, 1.0
        %v2155 = vadd.f32 %v2123, 1.0
        %v2156 = vadd.f32 %v2124, 1.0
        %v2157 = vadd.f32 %v2125, 1.0
        %v2158 = vadd.f32 %v2126, 1.0
        %v2159 = vadd.f32 %v2127, 1.0
        %v2160 = vadd.f32 %v2128, 1.0
        %v2161 = vadd.f32 %v2129, 1.0
        %v2162 = vadd.f32 %v2130, 1.0
        %v2163 = vadd.f32 %v2131, 1.0
        %v2164 = vadd.f32 %v2132, 1.0
        %v2165 = vadd.f32 %v2133, 1.0
        %v2166 = vadd.f32 %v2134, 1.0
        %v2167 = vadd.f32 %v2135, 1.0
        %v2168 = vadd.f32 %v2136, 1.0
        %v2169 = vadd.f32 %v2137, 1.0
        %v2170 = vadd.f32 %v2138, 1.0
        %v2171 = vadd.f32 %v2139, 1.0
        %v2172 = vrcp.pop %v2140
        %v2173 = vrcp.pop %v2141
        %v2174 = vrcp.pop %v2142
        %v2175 = vrcp.pop %v2143
        %v2176 = vrcp.pop %v2144
        %v2177 = vrcp.pop %v2145
        %v2178 = vrcp.pop %v2146
        %v2179 = vrcp.pop %v2147
        %v2180 = vrcp.pop %v2148
        %v2181 = vrcp.pop %v2149
        %v2182 = vrcp.pop %v2150
        %v2183 = vrcp.pop %v2151
        %v2184 = vrcp.pop %v2152
        %v2185 = vrcp.pop %v2153
        %v2186 = vrcp.pop %v2154
        %v2187 = vrcp.pop %v2155
        %v2188 = vrcp.pop %v2156
        %v2189 = vrcp.pop %v2157
        %v2190 = vrcp.pop %v2158
        %v2191 = vrcp.pop %v2159
        %v2192 = vrcp.pop %v2160
        %v2193 = vrcp.pop %v2161
        %v2194 = vrcp.pop %v2162
        %v2195 = vrcp.pop %v2163
        %v2196 = vrcp.pop %v2164
        %v2197 = vrcp.pop %v2165
        %v2198 = vrcp.pop %v2166
        %v2199 = vrcp.pop %v2167
        %v2200 = vrcp.pop %v2168
        %v2201 = vrcp.pop %v2169
        %v2202 = vrcp.pop %v2170
        %v2203 = vrcp.pop %v2171
        %v2204 = vmul.f32 %v2076, %v2172
        %v2205 = vmul.f32 %v2077, %v2173
        %v2206 = vmul.f32 %v2078, %v2174
        %v2207 = vmul.f32 %v2079, %v2175
        %v2208 = vmul.f32 %v2080, %v2176
        %v2209 = vmul.f32 %v2081, %v2177
        %v2210 = vmul.f32 %v2082, %v2178
        %v2211 = vmul.f32 %v2083, %v2179
        %v2212 = vmul.f32 %v2084, %v2180
        %v2213 = vmul.f32 %v2085, %v2181
        %v2214 = vmul.f32 %v2086, %v2182
        %v2215 = vmul.f32 %v2087, %v2183
        %v2216 = vmul.f32 %v2088, %v2184
        %v2217 = vmul.f32 %v2089, %v2185
        %v2218 = vmul.f32 %v2090, %v2186
        %v2219 = vmul.f32 %v2091, %v2187
        %v2220 = vmul.f32 %v2092, %v2188
        %v2221 = vmul.f32 %v2093, %v2189
        %v2222 = vmul.f32 %v2094, %v2190
        %v2223 = vmul.f32 %v2095, %v2191
        %v2224 = vmul.f32 %v2096, %v2192
        %v2225 = vmul.f32 %v2097, %v2193
        %v2226 = vmul.f32 %v2098, %v2194
        %v2227 = vmul.f32 %v2099, %v2195
        %v2228 = vmul.f32 %v2100, %v2196
        %v2229 = vmul.f32 %v2101, %v2197
        %v2230 = vmul.f32 %v2102, %v2198
        %v2231 = vmul.f32 %v2103, %v2199
        %v2232 = vmul.f32 %v2104, %v2200
        %v2233 = vmul.f32 %v2105, %v2201
        %v2234 = vmul.f32 %v2106, %v2202
        %v2235 = vmul.f32 %v2107, %v2203
        %v2236 = vmul.f32 %v1730, %v2204
        %v2237 = vmul.f32 %v1737, %v2205
        %v2238 = vmul.f32 %v1744, %v2206
        %v2239 = vmul.f32 %v1751, %v2207
        %v2240 = vmul.f32 %v1758, %v2208
        %v2241 = vmul.f32 %v1765, %v2209
        %v2242 = vmul.f32 %v1772, %v2210
        %v2243 = vmul.f32 %v1779, %v2211
        %v2244 = vmul.f32 %v1786, %v2212
        %v2245 = vmul.f32 %v1793, %v2213
        %v2246 = vmul.f32 %v1800, %v2214
        %v2247 = vmul.f32 %v1807, %v2215
        %v2248 = vmul.f32 %v1814, %v2216
        %v2249 = vmul.f32 %v1821, %v2217
        %v2250 = vmul.f32 %v1828, %v2218
        %v2251 = vmul.f32 %v1835, %v2219
        %v2252 = vmul.f32 %v1842, %v2220
        %v2253 = vmul.f32 %v1849, %v2221
        %v2254 = vmul.f32 %v1856, %v2222
        %v2255 = vmul.f32 %v1863, %v2223
        %v2256 = vmul.f32 %v1870, %v2224
        %v2257 = vmul.f32 %v1877, %v2225
        %v2258 = vmul.f32 %v1884, %v2226
        %v2259 = vmul.f32 %v1891, %v2227
        %v2260 = vmul.f32 %v1898, %v2228
        %v2261 = vmul.f32 %v1905, %v2229
        %v2262 = vmul.f32 %v1912, %v2230
        %v2263 = vmul.f32 %v1919, %v2231
        %v2264 = vmul.f32 %v1926, %v2232
        %v2265 = vmul.f32 %v1933, %v2233
        %v2266 = vmul.f32 %v1940, %v2234
        %v2267 = vmul.f32 %v1947, %v2235
        %v2268 = vadd.f32 %v1730, %v2236
        %v2269 = vadd.f32 %v1737, %v2237
        %v2270 = vadd.f32 %v1744, %v2238
        %v2271 = vadd.f32 %v1751, %v2239
        %v2272 = vadd.f32 %v1758, %v2240
        %v2273 = vadd.f32 %v1765, %v2241
        %v2274 = vadd.f32 %v1772, %v2242
        %v2275 = vadd.f32 %v1779, %v2243
        %v2276 = vadd.f32 %v1786, %v2244
        %v2277 = vadd.f32 %v1793, %v2245
        %v2278 = vadd.f32 %v1800, %v2246
        %v2279 = vadd.f32 %v1807, %v2247
        %v2280 = vadd.f32 %v1814, %v2248
        %v2281 = vadd.f32 %v1821, %v2249
        %v2282 = vadd.f32 %v1828, %v2250
        %v2283 = vadd.f32 %v1835, %v2251
        %v2284 = vadd.f32 %v1842, %v2252
        %v2285 = vadd.f32 %v1849, %v2253
        %v2286 = vadd.f32 %v1856, %v2254
        %v2287 = vadd.f32 %v1863, %v2255
        %v2288 = vadd.f32 %v1870, %v2256
        %v2289 = vadd.f32 %v1877, %v2257
        %v2290 = vadd.f32 %v1884, %v2258
        %v2291 = vadd.f32 %v1891, %v2259
        %v2292 = vadd.f32 %v1898, %v2260
        %v2293 = vadd.f32 %v1905, %v2261
        %v2294 = vadd.f32 %v1912, %v2262
        %v2295 = vadd.f32 %v1919, %v2263
        %v2296 = vadd.f32 %v1926, %v2264
        %v2297 = vadd.f32 %v1933, %v2265
        %v2298 = vadd.f32 %v1940, %v2266
        %v2299 = vadd.f32 %v1947, %v2267
        %v2300 = vmul.f32 %v2268, 2.0
        %v2301 = vmul.f32 %v2269, 2.0
        %v2302 = vmul.f32 %v2270, 2.0
        %v2303 = vmul.f32 %v2271, 2.0
        %v2304 = vmul.f32 %v2272, 2.0
        %v2305 = vmul.f32 %v2273, 2.0
        %v2306 = vmul.f32 %v2274, 2.0
        %v2307 = vmul.f32 %v2275, 2.0
        %v2308 = vmul.f32 %v2276, 2.0
        %v2309 = vmul.f32 %v2277, 2.0
        %v2310 = vmul.f32 %v2278, 2.0
        %v2311 = vmul.f32 %v2279, 2.0
        %v2312 = vmul.f32 %v2280, 2.0
        %v2313 = vmul.f32 %v2281, 2.0
        %v2314 = vmul.f32 %v2282, 2.0
        %v2315 = vmul.f32 %v2283, 2.0
        %v2316 = vmul.f32 %v2284, 2.0
        %v2317 = vmul.f32 %v2285, 2.0
        %v2318 = vmul.f32 %v2286, 2.0
        %v2319 = vmul.f32 %v2287, 2.0
        %v2320 = vmul.f32 %v2288, 2.0
        %v2321 = vmul.f32 %v2289, 2.0
        %v2322 = vmul.f32 %v2290, 2.0
        %v2323 = vmul.f32 %v2291, 2.0
        %v2324 = vmul.f32 %v2292, 2.0
        %v2325 = vmul.f32 %v2293, 2.0
        %v2326 = vmul.f32 %v2294, 2.0
        %v2327 = vmul.f32 %v2295, 2.0
        %v2328 = vmul.f32 %v2296, 2.0
        %v2329 = vmul.f32 %v2297, 2.0
        %v2330 = vmul.f32 %v2298, 2.0
        %v2331 = vmul.f32 %v2299, 2.0
        %v2332 = vsub.f32 1.5707964, %v2300
        %v2333 = vsub.f32 1.5707964, %v2301
        %v2334 = vsub.f32 1.5707964, %v2302
        %v2335 = vsub.f32 1.5707964, %v2303
        %v2336 = vsub.f32 1.5707964, %v2304
        %v2337 = vsub.f32 1.5707964, %v2305
        %v2338 = vsub.f32 1.5707964, %v2306
        %v2339 = vsub.f32 1.5707964, %v2307
        %v2340 = vsub.f32 1.5707964, %v2308
        %v2341 = vsub.f32 1.5707964, %v2309
        %v2342 = vsub.f32 1.5707964, %v2310
        %v2343 = vsub.f32 1.5707964, %v2311
        %v2344 = vsub.f32 1.5707964, %v2312
        %v2345 = vsub.f32 1.5707964, %v2313
        %v2346 = vsub.f32 1.5707964, %v2314
        %v2347 = vsub.f32 1.5707964, %v2315
        %v2348 = vsub.f32 1.5707964, %v2316
        %v2349 = vsub.f32 1.5707964, %v2317
        %v2350 = vsub.f32 1.5707964, %v2318
        %v2351 = vsub.f32 1.5707964, %v2319
        %v2352 = vsub.f32 1.5707964, %v2320
        %v2353 = vsub.f32 1.5707964, %v2321
        %v2354 = vsub.f32 1.5707964, %v2322
        %v2355 = vsub.f32 1.5707964, %v2323
        %v2356 = vsub.f32 1.5707964, %v2324
        %v2357 = vsub.f32 1.5707964, %v2325
        %v2358 = vsub.f32 1.5707964, %v2326
        %v2359 = vsub.f32 1.5707964, %v2327
        %v2360 = vsub.f32 1.5707964, %v2328
        %v2361 = vsub.f32 1.5707964, %v2329
        %v2362 = vsub.f32 1.5707964, %v2330
        %v2363 = vsub.f32 1.5707964, %v2331
        %v2364 = vsel %vm1596, %v2268, %v2332
        %v2365 = vsel %vm1597, %v2269, %v2333
        %v2366 = vsel %vm1598, %v2270, %v2334
        %v2367 = vsel %vm1599, %v2271, %v2335
        %v2368 = vsel %vm1600, %v2272, %v2336
        %v2369 = vsel %vm1601, %v2273, %v2337
        %v2370 = vsel %vm1602, %v2274, %v2338
        %v2371 = vsel %vm1603, %v2275, %v2339
        %v2372 = vsel %vm1604, %v2276, %v2340
        %v2373 = vsel %vm1605, %v2277, %v2341
        %v2374 = vsel %vm1606, %v2278, %v2342
        %v2375 = vsel %vm1607, %v2279, %v2343
        %v2376 = vsel %vm1608, %v2280, %v2344
        %v2377 = vsel %vm1609, %v2281, %v2345
        %v2378 = vsel %vm1610, %v2282, %v2346
        %v2379 = vsel %vm1611, %v2283, %v2347
        %v2380 = vsel %vm1612, %v2284, %v2348
        %v2381 = vsel %vm1613, %v2285, %v2349
        %v2382 = vsel %vm1614, %v2286, %v2350
        %v2383 = vsel %vm1615, %v2287, %v2351
        %v2384 = vsel %vm1616, %v2288, %v2352
        %v2385 = vsel %vm1617, %v2289, %v2353
        %v2386 = vsel %vm1618, %v2290, %v2354
        %v2387 = vsel %vm1619, %v2291, %v2355
        %v2388 = vsel %vm1620, %v2292, %v2356
        %v2389 = vsel %vm1621, %v2293, %v2357
        %v2390 = vsel %vm1622, %v2294, %v2358
        %v2391 = vsel %vm1623, %v2295, %v2359
        %v2392 = vsel %vm1624, %v2296, %v2360
        %v2393 = vsel %vm1625, %v2297, %v2361
        %v2394 = vsel %vm1626, %v2298, %v2362
        %v2395 = vsel %vm1627, %v2299, %v2363
        %v2396 = vadd.f32 %v2364, %v2366
        %v2397 = vadd.f32 %v2396, %v2368
        %v2398 = vadd.f32 %v2397, %v2370
        %v2399 = vadd.f32 %v2398, %v2372
        %v2400 = vadd.f32 %v2399, %v2374
        %v2401 = vadd.f32 %v2400, %v2376
        %v2402 = vadd.f32 %v2401, %v2378
        %v2403 = vadd.f32 %v2402, %v2380
        %v2404 = vadd.f32 %v2403, %v2382
        %v2405 = vadd.f32 %v2404, %v2384
        %v2406 = vadd.f32 %v2405, %v2386
        %v2407 = vadd.f32 %v2406, %v2388
        %v2408 = vadd.f32 %v2407, %v2390
        %v2409 = vadd.f32 %v2408, %v2392
        %v2410 = vadd.f32 %v2409, %v2394
        %v2411 = vadd.f32 %v2365, %v2367
        %v2412 = vadd.f32 %v2411, %v2369
        %v2413 = vadd.f32 %v2412, %v2371
        %v2414 = vadd.f32 %v2413, %v2373
        %v2415 = vadd.f32 %v2414, %v2375
        %v2416 = vadd.f32 %v2415, %v2377
        %v2417 = vadd.f32 %v2416, %v2379
        %v2418 = vadd.f32 %v2417, %v2381
        %v2419 = vadd.f32 %v2418, %v2383
        %v2420 = vadd.f32 %v2419, %v2385
        %v2421 = vadd.f32 %v2420, %v2387
        %v2422 = vadd.f32 %v2421, %v2389
        %v2423 = vadd.f32 %v2422, %v2391
        %v2424 = vadd.f32 %v2423, %v2393
        %v2425 = vadd.f32 %v2424, %v2395
        %v2426 = vadd.f32 %v2410, %v2425
        %v2427 = vrot.slane %v2426, 4
        %v2428 = vadd.f32 %v2426, %v2427
        %v2429 = vrot.slane %v2428, 2
        %v2430 = vadd.f32 %v2428, %v2429
        %v2431 = vrot.slane %v2430, 1
        %v2432 = vadd.f32 %v2430, %v2431
        %s2433 = sld [smem:[#allocation2]]
        %v2434 = vstv %s2433
        %v2435 = vrcp.pop %v2434
        %s2436 = vtos %v2435
        %s2437 = smul.f32 %s2436, 0.0625
        %v2438 = vstv %s2437
        %v2439 = vmul.f32 %v2432, %v2438
        %v2440 = vrcp.pop %v2410
        %v2441 = vrcp.pop %v2425
        %v2442 = vmul.f32 %v2439, %v2440
        %v2443 = vmul.f32 %v2439, %v2441
        %v2444 = vmax.f32 %v2442, %v2443
        %v2445 = vrot.slane %v2444, 4
        %v2446 = vmax.f32 %v2444, %v2445
        %v2447 = vrot.slane %v2446, 2
        %v2448 = vmax.f32 %v2446, %v2447
        %v2449 = vrot.slane %v2448, 1
        %v2450 = vmax.f32 %v2448, %v2449
        %v2451 = vsub.f32 %v2442, %v2450
        %v2452 = vsub.f32 %v2443, %v2450
        %v2453 = vmul.f32 %v2451, 1.442695
        %v2454 = vpow.pop %v2453
        %v2455 = vmul.f32 %v2452, 1.442695
        %v2456 = vpow.pop %v2455
        %v2457 = vadd.f32 %v2454, %v2456
        %v2458 = vrot.slane %v2457, 4
        %v2459 = vadd.f32 %v2457, %v2458
        %v2460 = vrot.slane %v2459, 2
        %v2461 = vadd.f32 %v2459, %v2460
        %v2462 = vrot.slane %v2461, 1
        %v2463 = vadd.f32 %v2461, %v2462
        %v2464 = vrcp.pop %v2463
        %v2465 = vmul.f32 %v2454, %v2464
        %v2466 = vmul.f32 %v2456, %v2464
        %v2467 = vld [vmem:[%s200] sm:$0xff]
        %v2468 = vld [vmem:[%s200 + $0x8] sm:$0xff]
        %v2469 = vadd.f32 %v2467, %v2468
        %v2470 = vrot.slane %v2469, 4
        %v2471 = vadd.f32 %v2469, %v2470
        %v2472 = vrot.slane %v2471, 2
        %v2473 = vadd.f32 %v2471, %v2472
        %v2474 = vrot.slane %v2473, 1
        %v2475 = vadd.f32 %v2473, %v2474
        %v2476 = vmul.f32 %v2467, %v2465
        %v2477 = vmul.f32 %v2468, %v2466
        %v2478 = vadd.f32 %v2476, %v2477
        %v2479 = vrot.slane %v2478, 4
        %v2480 = vadd.f32 %v2478, %v2479
        %v2481 = vrot.slane %v2480, 2
        %v2482 = vadd.f32 %v2480, %v2481
        %v2483 = vrot.slane %v2482, 1
        %v2484 = vadd.f32 %v2482, %v2483
        %v2485 = vrcp.pop %v2484
        %v2486 = vmul.f32 %v2475, %v2485
        %v2487 = vmul.f32 %v2476, %v2486
        %v2488 = vmul.f32 %v2477, %v2486
        %2489 = vst [vmem:[%s227] sm:$0xff] %v2487
        %2490 = vst [vmem:[%s227 + $0x8] sm:$0xff] %v2488
        %s2491 = sand.u32 %s105, 1
        %s2492 = scalar_lea.sflag [#allocation5], %s2491
        %s2493 = sand.u32 %s105, 1
        %s2494 = smul.addr %s2493, 16
        %s2495 = scalar_lea.vmem [#allocation8], %s2494
        // Predicated region
        $region41: #{tpu_custom_call.1} parent=31 // pred_check
          %p2496 = pneg %p115
        $region42: #{tpu_custom_call.1} parent=31 // pred_check_branch
          %2498 = sbr.rel (%p2496) target = $region44
        $region43: #{tpu_custom_call.1} parent=31 // pred_region
          %s2500 = ssub.s32 256, 256
          %2501 = vsyncadd %s2492, %s2500
          %s2502 = smul.addr %s24, 128
          %s2503 = scalar_lea.hbm %s3, %s2502
          %s2504 = sshll.u32 %s2495, 4
          %s2505 = int_to_ptr.vmem [resolvable:$true] %s2504
          %2510 = dma.vmem_to_hbm [thread:$0]  %s2505, 256, %s2503, %s2492, 128, 256, 8
        $region44: #{tpu_custom_call.1} parent=31 // pred_fallthru
          _
      $region32: #{tpu_custom_call.1} parent=5 // pred_fallthru
        _
      %p2511 = scmp.le.s32.totalorder 2, %s19
      // Predicated region
      $region45: #{tpu_custom_call.1} parent=5 // pred_check
        %p2512 = pneg %p2511
      $region46: #{tpu_custom_call.1} parent=5 // pred_check_branch
        %2514 = sbr.rel (%p2512) target = $region48
      $region47: #{tpu_custom_call.1} parent=5 // pred_region
        %s2515 = ssub.s32 %s19, 2
        // Predicated region
        $region49: #{tpu_custom_call.1} parent=47 // pred_check
          %p2516 = pneg %p121
        $region50: #{tpu_custom_call.1} parent=47 // pred_check_branch
          %2518 = sbr.rel (%p2516) target = $region52
        $region51: #{tpu_custom_call.1} parent=47 // pred_region
          %s2519 = sand.u32 %s106, 1
          %s2520 = scalar_lea.sflag [#allocation5], %s2519
          %s2521 = sand.u32 %s106, 1
          %s2522 = smul.addr %s2521, 16
          %s2523 = scalar_lea.vmem [#allocation8], %s2522
          %2524 = dma.done %s2520, 256
        $region52: #{tpu_custom_call.1} parent=47 // pred_fallthru
          _
      $region48: #{tpu_custom_call.1} parent=5 // pred_fallthru
        _
    $region6: #{tpu_custom_call.1} parent=1 // loop_footer
      %s23 = sadd.s32 1, %s19
    $region7: #{tpu_custom_call.1} parent=1 // loop_footer_branch
      %18 = sbr.rel target = $region3
    $region8: #{tpu_custom_call.1} parent=1 // loop_exit
      _
    %2525 = vsyncpa [#allocation4], 1
    %s2526 = scalar_lea.sflag [#allocation4], 1
    %2527 = vsyncpa %s2526, 1
    %2528 = vsyncpa [#allocation7], 1
    %s2529 = scalar_lea.sflag [#allocation7], 1
    %2530 = vsyncpa %s2529, 1
    %2531 = vsyncpa [#allocation5], 1
    %s2532 = scalar_lea.sflag [#allocation5], 1
    %2533 = vsyncpa %s2532, 1

</llo_original>
